<compile_context>
chip_gen: v6e
topology: v6e:2x2x1
jax: 0.10.0
libtpu: 0.0.40
codegen_flags: <defaults>
</compile_context>

<pallas_src>
import functools

import jax
import jax.numpy as jnp
from jax.experimental import pallas as pl
from jax.experimental.pallas import tpu as pltpu

OUT_PAD = 128  # lane-dense classifier output width (true num_types is sliced in the wrapper)


# ----------------------------------------------------------------------------
# Fused per-sample kernel: text proj + GCN stack + masked max-pool + MLP head.
# ----------------------------------------------------------------------------
def make_fused_kernel(num_gcn_layers):
    def kernel(*refs):
        (emb_ref, wt_ref, bt_ref, feats_ref, adj_ref,
         tmask_ref, gmask_ref) = refs[:7]
        idx = 7
        gcn_refs = []
        for _ in range(num_gcn_layers):
            gcn_refs.append((refs[idx], refs[idx + 1]))
            idx += 2
        w1_ref, b1_ref, w2_ref, b2_ref = refs[idx:idx + 4]
        out_ref = refs[idx + 4]

        # ---- text branch: [S, Rd] @ [Rd, H] on the MXU -------------------------
        # TODO(synk): at real RoBERTa scale cast MXU operands to bf16 (keep f32 accum);
        # kept f32 here so the toy-size 1e-3 reference check holds.
        text = jnp.tanh(
            jnp.dot(emb_ref[0], wt_ref[...], preferred_element_type=jnp.float32)
            + bt_ref[...]
        )                                                    # [S, H]

        # ---- graph branch: GCN stack, re-associated as A @ (X @ W) -------------
        adj = adj_ref[0]                                     # [N, N]
        h = feats_ref[0]                                     # [N, D0]
        for (w_ref, b_ref) in gcn_refs:
            xw = jnp.dot(h, w_ref[...], preferred_element_type=jnp.float32)
            h = jnp.maximum(
                jnp.dot(adj, xw, preferred_element_type=jnp.float32) + b_ref[...],
                0.0,
            )                                                # [N, dout]
        graph = jax.nn.sigmoid(h)                            # [N, H]

        # ---- masked max-pool over concat(text, graph) along the seq axis -------
        # Additive -1e10 mask == reference semantics (finite for fully-masked rows,
        # tolerates soft masks).  [S,1]/[N,1] masks lane-broadcast over H (VPU only).
        mtext = text - 1e10 * (1.0 - tmask_ref[0])
        mgraph = graph - 1e10 * (1.0 - gmask_ref[0])
        # max over a concatenation == max of per-part maxima -> no concat needed.
        pooled = jnp.maximum(jnp.max(mtext, axis=0),
                             jnp.max(mgraph, axis=0)).reshape(1, -1)   # [1, H]

        # ---- MLP head, lane-dense padded output ---------------------------------
        hid = jnp.maximum(
            jnp.dot(pooled, w1_ref[...], preferred_element_type=jnp.float32)
            + b1_ref[...],
            0.0,
        )                                                    # [1, 128]
        # TODO(synk): nn.Dropout is identity here (eval mode).
        out_ref[0] = (
            jnp.dot(hid, w2_ref[...], preferred_element_type=jnp.float32)
            + b2_ref[...]
        )                                                    # [1, OUT_PAD]

    return kernel


# ----------------------------------------------------------------------------
# One-time parameter prep (hoisted out of the per-call path per perf review).
# ----------------------------------------------------------------------------
def prepare_params(params):
    T = params["w2"].shape[1]
    w2p = jnp.zeros((params["w2"].shape[0], OUT_PAD), jnp.float32).at[:, :T].set(params["w2"])
    b2p = jnp.zeros((1, OUT_PAD), jnp.float32).at[:, :T].set(params["b2"])
    prepped = dict(params)
    prepped["w2p"] = w2p
    prepped["b2p"] = b2p
    return prepped


# ----------------------------------------------------------------------------
# Full forward (gather + mask-shaping glue in plain JAX under jit; the rest fused in Pallas)
# ----------------------------------------------------------------------------
@functools.partial(jax.jit, static_argnames=("num_types",))
def type_classifier_forward(params, input_ids, attn_mask, adj, feats, graph_mask, *, num_types):
    B, S = input_ids.shape
    N = feats.shape[1]

    # TODO(synk): full RoBERTa backbone has no clean Pallas equivalent; replaced by a
    # deterministic embedding lookup (one XLA gather under jit) + in-kernel tanh projection.
    # At real scale move this gather into the kernel (scalar-prefetched ids + DMA gather)
    # to avoid the HBM round-trip of the [B,S,Rd] activation.
    emb = params["embed"][input_ids]                         # [B, S, Rd]
    Rd = emb.shape[-1]
    H = params["wt"].shape[1]
    D0 = feats.shape[-1]

    # TODO(synk): PyG batch construction / split_graph_features replaced by padded
    # per-sample node features + normalized adjacency (semantically equivalent output).

    # Masks pre-shaped [B,S,1]/[B,N,1] so the kernel broadcast over H is lane-only.
    tmask = attn_mask.astype(jnp.float32)[:, :, None]        # [B, S, 1]
    gmask = graph_mask.astype(jnp.float32)[:, :, None]       # [B, N, 1]

    gcn_flat, gcn_specs = [], []
    for (w, b) in params["gcn"]:
        gcn_flat += [w, b]
        gcn_specs += [pl.BlockSpec(w.shape, lambda bi: (0, 0)),
                      pl.BlockSpec(b.shape, lambda bi: (0, 0))]

    inputs = [emb, params["wt"], params["bt"], feats, adj, tmask, gmask,
              *gcn_flat, params["w1"], params["b1"], params["w2p"], params["b2p"]]

    # Per-sample activation blocks; weights use a constant index_map so they stay
    # VMEM-resident across grid iterations (no re-DMA).
    in_specs = [
        pl.BlockSpec((1, S, Rd), lambda bi: (bi, 0, 0)),     # emb
        pl.BlockSpec((Rd, H), lambda bi: (0, 0)),            # wt
        pl.BlockSpec((1, H), lambda bi: (0, 0)),             # bt
        pl.BlockSpec((1, N, D0), lambda bi: (bi, 0, 0)),     # feats
        pl.BlockSpec((1, N, N), lambda bi: (bi, 0, 0)),      # adj
        pl.BlockSpec((1, S, 1), lambda bi: (bi, 0, 0)),      # text mask
        pl.BlockSpec((1, N, 1), lambda bi: (bi, 0, 0)),      # graph mask
        *gcn_specs,
        pl.BlockSpec((H, 128), lambda bi: (0, 0)),           # w1
        pl.BlockSpec((1, 128), lambda bi: (0, 0)),           # b1
        pl.BlockSpec((128, OUT_PAD), lambda bi: (0, 0)),     # w2 (lane-padded)
        pl.BlockSpec((1, OUT_PAD), lambda bi: (0, 0)),       # b2 (lane-padded)
    ]

    out = pl.pallas_call(
        make_fused_kernel(len(params["gcn"])),
        out_shape=jax.ShapeDtypeStruct((B, 1, OUT_PAD), jnp.float32),
        grid=(B,),
        in_specs=in_specs,
        out_specs=pl.BlockSpec((1, 1, OUT_PAD), lambda bi: (bi, 0, 0)),
        # No vmem_limit override: per-step blocks are tiny; defaults fit v5e/v6e/v7x.
        compiler_params=pltpu.CompilerParams(dimension_semantics=("parallel",)),
    )(*inputs)
    return out[:, 0, :num_types]


# ----------------------------------------------------------------------------
# Pure-JAX reference (mirrors the PyTorch forward with the same stand-ins)
# ----------------------------------------------------------------------------
def reference_forward(params, input_ids, attn_mask, adj, feats, graph_mask):
    emb = params["embed"][input_ids]
    text = jnp.tanh(emb @ params["wt"] + params["bt"][0])
    h = feats
    for (w, b) in params["gcn"]:
        h = jax.nn.relu(jnp.einsum("bnm,bmd->bnd", adj, h) @ w + b[0])
    graph = jax.nn.sigmoid(h)
    out = jnp.concatenate([text, graph], axis=1)
    mask = jnp.concatenate([attn_mask, graph_mask], axis=-1).astype(jnp.float32)
    out = out - 1e10 * (1.0 - mask[:, :, None])
    out = out.max(axis=1)
    out = jax.nn.relu(out @ params["w1"] + params["b1"][0])
    return out @ params["w2"] + params["b2"][0]


# ----------------------------------------------------------------------------
if __name__ == "__main__":
    # small shapes consistent with the module
    B, S, N = 2, 8, 8            # batch, text seq len, max graph nodes
    GLOVE, RDIM, HID = 16, 24, 32
    NUM_TYPES, LAYERS, VOCAB = 6, 2, 100

    key = jax.random.PRNGKey(0)
    ks = jax.random.split(key, 16)

    # deterministic parameters
    gcn_params = []
    din = GLOVE
    for l in range(LAYERS):
        w = 0.1 * jax.random.normal(ks[l], (din, HID), jnp.float32)
        b = 0.01 * jax.random.normal(ks[4 + l], (1, HID), jnp.float32)
        gcn_params.append((w, b))
        din = HID
    params = {
        "gcn": gcn_params,
        "embed": 0.1 * jax.random.normal(ks[8], (VOCAB, RDIM), jnp.float32),
        "wt": 0.1 * jax.random.normal(ks[9], (RDIM, HID), jnp.float32),
        "bt": 0.01 * jax.random.normal(ks[10], (1, HID), jnp.float32),
        "w1": 0.1 * jax.random.normal(ks[11], (HID, 128), jnp.float32),
        "b1": 0.01 * jax.random.normal(ks[12], (1, 128), jnp.float32),
        "w2": 0.1 * jax.random.normal(ks[13], (128, NUM_TYPES), jnp.float32),
        "b2": 0.01 * jax.random.normal(ks[14], (1, NUM_TYPES), jnp.float32),
    }

    # deterministic inputs
    input_ids = jax.random.randint(ks[15], (B, S), 0, VOCAB)
    attn_mask = (jnp.arange(S)[None, :] < jnp.array([6, 8])[:, None]).astype(jnp.float32)
    feats = jax.random.normal(ks[7], (B, N, GLOVE), jnp.float32)
    graph_mask = (jnp.arange(N)[None, :] < jnp.array([5, 7])[:, None]).astype(jnp.float32)
    # simple symmetric ring adjacency + self-loops, row-normalized
    eye = jnp.eye(N, dtype=jnp.float32)
    ring = jnp.roll(eye, 1, axis=1) + jnp.roll(eye, -1, axis=1)
    a = eye + ring
    a = a / a.sum(axis=1, keepdims=True)
    adj = jnp.broadcast_to(a, (B, N, N))

    # one-time param prep (classifier padded to 128 lanes), then jitted forward
    prepped = prepare_params(params)
    out = type_classifier_forward(prepped, input_ids, attn_mask, adj, feats, graph_mask,
                                  num_types=NUM_TYPES)
    out = jax.block_until_ready(out)

    ref = reference_forward(params, input_ids, attn_mask, adj, feats, graph_mask)
    assert out.shape == (B, NUM_TYPES)
    assert bool(jnp.allclose(out, ref, atol=1e-3, rtol=1e-3)), "mismatch vs reference"

    print("KERNEL_OK")
</pallas_src>

<mosaic_0001>
module attributes {stable_mosaic.version = 11 : i64} {
  func.func @kernel(%arg0: i32, %arg1: memref<1x8x24xf32, #tpu.memory_space<vmem>>, %arg2: memref<24x32xf32, #tpu.memory_space<vmem>>, %arg3: memref<1x32xf32, #tpu.memory_space<vmem>>, %arg4: memref<1x8x16xf32, #tpu.memory_space<vmem>>, %arg5: memref<1x8x8xf32, #tpu.memory_space<vmem>>, %arg6: memref<1x8x1xf32, #tpu.memory_space<vmem>>, %arg7: memref<1x8x1xf32, #tpu.memory_space<vmem>>, %arg8: memref<16x32xf32, #tpu.memory_space<vmem>>, %arg9: memref<1x32xf32, #tpu.memory_space<vmem>>, %arg10: memref<32x32xf32, #tpu.memory_space<vmem>>, %arg11: memref<1x32xf32, #tpu.memory_space<vmem>>, %arg12: memref<32x128xf32, #tpu.memory_space<vmem>>, %arg13: memref<1x128xf32, #tpu.memory_space<vmem>>, %arg14: memref<128x128xf32, #tpu.memory_space<vmem>>, %arg15: memref<1x128xf32, #tpu.memory_space<vmem>>, %arg16: memref<1x1x128xf32, #tpu.memory_space<vmem>>) attributes {dimension_semantics = [#tpu.dimension_semantics<parallel>], iteration_bounds = array<i64: 2>, scalar_prefetch = 0 : i64, scratch_operands = 0 : i64, tpu.core_type = #tpu.core_type<tc>, window_params = [{transform_indices = @transform_0, window_bounds = array<i64: 1, 8, 24>}, {pipeline_mode = #tpu.pipeline_mode<synchronous>, transform_indices = @transform_1, window_bounds = array<i64: 24, 32>}, {pipeline_mode = #tpu.pipeline_mode<synchronous>, transform_indices = @transform_2, window_bounds = array<i64: 1, 32>}, {transform_indices = @transform_3, window_bounds = array<i64: 1, 8, 16>}, {transform_indices = @transform_4, window_bounds = array<i64: 1, 8, 8>}, {transform_indices = @transform_5, window_bounds = array<i64: 1, 8, 1>}, {transform_indices = @transform_6, window_bounds = array<i64: 1, 8, 1>}, {pipeline_mode = #tpu.pipeline_mode<synchronous>, transform_indices = @transform_7, window_bounds = array<i64: 16, 32>}, {pipeline_mode = #tpu.pipeline_mode<synchronous>, transform_indices = @transform_8, window_bounds = array<i64: 1, 32>}, {pipeline_mode = #tpu.pipeline_mode<synchronous>, transform_indices = @transform_9, window_bounds = array<i64: 32, 32>}, {pipeline_mode = #tpu.pipeline_mode<synchronous>, transform_indices = @transform_10, window_bounds = array<i64: 1, 32>}, {pipeline_mode = #tpu.pipeline_mode<synchronous>, transform_indices = @transform_11, window_bounds = array<i64: 32, 128>}, {pipeline_mode = #tpu.pipeline_mode<synchronous>, transform_indices = @transform_12, window_bounds = array<i64: 1, 128>}, {pipeline_mode = #tpu.pipeline_mode<synchronous>, transform_indices = @transform_13, window_bounds = array<i64: 128, 128>}, {pipeline_mode = #tpu.pipeline_mode<synchronous>, transform_indices = @transform_14, window_bounds = array<i64: 1, 128>}, {transform_indices = @transform_15, window_bounds = array<i64: 1, 1, 128>}]} {
    %c0 = arith.constant 0 : index
    %c0_0 = arith.constant 0 : index
    %c0_1 = arith.constant 0 : index
    %0 = vector.load %arg1[%c0, %c0_0, %c0_1] : memref<1x8x24xf32, #tpu.memory_space<vmem>>, vector<1x8x24xf32>
    %1 = vector.shape_cast %0 : vector<1x8x24xf32> to vector<8x24xf32>
    %c0_2 = arith.constant 0 : index
    %c0_3 = arith.constant 0 : index
    %2 = vector.load %arg2[%c0_2, %c0_3] : memref<24x32xf32, #tpu.memory_space<vmem>>, vector<24x32xf32>
    %cst = arith.constant dense<0.000000e+00> : vector<8x32xf32>
    %3 = tpu.matmul %1, %2, %cst {dimension_numbers = #tpu.dot_dimension_numbers<[1], [0], [0], [1], [0, 0, 1, 1], [], []>} : vector<8x24xf32>, vector<24x32xf32>, vector<8x32xf32> -> vector<8x32xf32>
    %c0_4 = arith.constant 0 : index
    %c0_5 = arith.constant 0 : index
    %4 = vector.load %arg3[%c0_4, %c0_5] : memref<1x32xf32, #tpu.memory_space<vmem>>, vector<1x32xf32>
    %5 = vector.broadcast %4 : vector<1x32xf32> to vector<8x32xf32>
    %6 = arith.addf %3, %5 : vector<8x32xf32>
    %7 = math.tanh %6 : vector<8x32xf32>
    %c0_6 = arith.constant 0 : index
    %c0_7 = arith.constant 0 : index
    %c0_8 = arith.constant 0 : index
    %8 = vector.load %arg5[%c0_6, %c0_7, %c0_8] : memref<1x8x8xf32, #tpu.memory_space<vmem>>, vector<1x8x8xf32>
    %9 = vector.shape_cast %8 : vector<1x8x8xf32> to vector<8x8xf32>
    %c0_9 = arith.constant 0 : index
    %c0_10 = arith.constant 0 : index
    %c0_11 = arith.constant 0 : index
    %10 = vector.load %arg4[%c0_9, %c0_10, %c0_11] : memref<1x8x16xf32, #tpu.memory_space<vmem>>, vector<1x8x16xf32>
    %11 = vector.shape_cast %10 : vector<1x8x16xf32> to vector<8x16xf32>
    %c0_12 = arith.constant 0 : index
    %c0_13 = arith.constant 0 : index
    %12 = vector.load %arg8[%c0_12, %c0_13] : memref<16x32xf32, #tpu.memory_space<vmem>>, vector<16x32xf32>
    %cst_14 = arith.constant dense<0.000000e+00> : vector<8x32xf32>
    %13 = tpu.matmul %11, %12, %cst_14 {dimension_numbers = #tpu.dot_dimension_numbers<[1], [0], [0], [1], [0, 0, 1, 1], [], []>} : vector<8x16xf32>, vector<16x32xf32>, vector<8x32xf32> -> vector<8x32xf32>
    %cst_15 = arith.constant dense<0.000000e+00> : vector<8x32xf32>
    %14 = tpu.matmul %9, %13, %cst_15 {dimension_numbers = #tpu.dot_dimension_numbers<[1], [0], [0], [1], [0, 0, 1, 1], [], []>} : vector<8x8xf32>, vector<8x32xf32>, vector<8x32xf32> -> vector<8x32xf32>
    %c0_16 = arith.constant 0 : index
    %c0_17 = arith.constant 0 : index
    %15 = vector.load %arg9[%c0_16, %c0_17] : memref<1x32xf32, #tpu.memory_space<vmem>>, vector<1x32xf32>
    %16 = vector.broadcast %15 : vector<1x32xf32> to vector<8x32xf32>
    %17 = arith.addf %14, %16 : vector<8x32xf32>
    %cst_18 = arith.constant 0.000000e+00 : f32
    %18 = vector.broadcast %cst_18 : f32 to vector<8x32xf32>
    %19 = arith.maximumf %17, %18 : vector<8x32xf32>
    %c0_19 = arith.constant 0 : index
    %c0_20 = arith.constant 0 : index
    %20 = vector.load %arg10[%c0_19, %c0_20] : memref<32x32xf32, #tpu.memory_space<vmem>>, vector<32x32xf32>
    %cst_21 = arith.constant dense<0.000000e+00> : vector<8x32xf32>
    %21 = tpu.matmul %19, %20, %cst_21 {dimension_numbers = #tpu.dot_dimension_numbers<[1], [0], [0], [1], [0, 0, 1, 1], [], []>} : vector<8x32xf32>, vector<32x32xf32>, vector<8x32xf32> -> vector<8x32xf32>
    %cst_22 = arith.constant dense<0.000000e+00> : vector<8x32xf32>
    %22 = tpu.matmul %9, %21, %cst_22 {dimension_numbers = #tpu.dot_dimension_numbers<[1], [0], [0], [1], [0, 0, 1, 1], [], []>} : vector<8x8xf32>, vector<8x32xf32>, vector<8x32xf32> -> vector<8x32xf32>
    %c0_23 = arith.constant 0 : index
    %c0_24 = arith.constant 0 : index
    %23 = vector.load %arg11[%c0_23, %c0_24] : memref<1x32xf32, #tpu.memory_space<vmem>>, vector<1x32xf32>
    %24 = vector.broadcast %23 : vector<1x32xf32> to vector<8x32xf32>
    %25 = arith.addf %22, %24 : vector<8x32xf32>
    %cst_25 = arith.constant 0.000000e+00 : f32
    %26 = vector.broadcast %cst_25 : f32 to vector<8x32xf32>
    %27 = arith.maximumf %25, %26 : vector<8x32xf32>
    %28 = arith.negf %27 : vector<8x32xf32>
    %29 = math.exp %28 : vector<8x32xf32>
    %cst_26 = arith.constant 1.000000e+00 : f32
    %30 = vector.broadcast %cst_26 : f32 to vector<8x32xf32>
    %31 = arith.addf %30, %29 : vector<8x32xf32>
    %32 = arith.divf %30, %31 : vector<8x32xf32>
    %c0_27 = arith.constant 0 : index
    %c0_28 = arith.constant 0 : index
    %c0_29 = arith.constant 0 : index
    %33 = vector.load %arg6[%c0_27, %c0_28, %c0_29] : memref<1x8x1xf32, #tpu.memory_space<vmem>>, vector<1x8x1xf32>
    %34 = vector.shape_cast %33 : vector<1x8x1xf32> to vector<8x1xf32>
    %cst_30 = arith.constant 1.000000e+00 : f32
    %35 = vector.broadcast %cst_30 : f32 to vector<8x1xf32>
    %36 = arith.subf %35, %34 : vector<8x1xf32>
    %cst_31 = arith.constant 1.000000e+10 : f32
    %37 = vector.broadcast %cst_31 : f32 to vector<8x1xf32>
    %38 = arith.mulf %37, %36 : vector<8x1xf32>
    %39 = vector.broadcast %38 : vector<8x1xf32> to vector<8x32xf32>
    %40 = arith.subf %7, %39 : vector<8x32xf32>
    %c0_32 = arith.constant 0 : index
    %c0_33 = arith.constant 0 : index
    %c0_34 = arith.constant 0 : index
    %41 = vector.load %arg7[%c0_32, %c0_33, %c0_34] : memref<1x8x1xf32, #tpu.memory_space<vmem>>, vector<1x8x1xf32>
    %42 = vector.shape_cast %41 : vector<1x8x1xf32> to vector<8x1xf32>
    %cst_35 = arith.constant 1.000000e+00 : f32
    %43 = vector.broadcast %cst_35 : f32 to vector<8x1xf32>
    %44 = arith.subf %43, %42 : vector<8x1xf32>
    %cst_36 = arith.constant 1.000000e+10 : f32
    %45 = vector.broadcast %cst_36 : f32 to vector<8x1xf32>
    %46 = arith.mulf %45, %44 : vector<8x1xf32>
    %47 = vector.broadcast %46 : vector<8x1xf32> to vector<8x32xf32>
    %48 = arith.subf %32, %47 : vector<8x32xf32>
    %cst_37 = arith.constant dense<0xFF800000> : vector<32xf32>
    %49 = vector.multi_reduction <maximumf>, %40, %cst_37 [0] : vector<8x32xf32> to vector<32xf32>
    %cst_38 = arith.constant dense<0xFF800000> : vector<32xf32>
    %50 = vector.multi_reduction <maximumf>, %48, %cst_38 [0] : vector<8x32xf32> to vector<32xf32>
    %51 = arith.maximumf %49, %50 : vector<32xf32>
    %52 = vector.shape_cast %51 : vector<32xf32> to vector<1x32xf32>
    %c0_39 = arith.constant 0 : index
    %c0_40 = arith.constant 0 : index
    %53 = vector.load %arg12[%c0_39, %c0_40] : memref<32x128xf32, #tpu.memory_space<vmem>>, vector<32x128xf32>
    %cst_41 = arith.constant dense<0.000000e+00> : vector<1x128xf32>
    %54 = tpu.matmul %52, %53, %cst_41 {dimension_numbers = #tpu.dot_dimension_numbers<[1], [0], [0], [1], [0, 0, 1, 1], [], []>} : vector<1x32xf32>, vector<32x128xf32>, vector<1x128xf32> -> vector<1x128xf32>
    %c0_42 = arith.constant 0 : index
    %c0_43 = arith.constant 0 : index
    %55 = vector.load %arg13[%c0_42, %c0_43] : memref<1x128xf32, #tpu.memory_space<vmem>>, vector<1x128xf32>
    %56 = arith.addf %54, %55 : vector<1x128xf32>
    %cst_44 = arith.constant 0.000000e+00 : f32
    %57 = vector.broadcast %cst_44 : f32 to vector<1x128xf32>
    %58 = arith.maximumf %56, %57 : vector<1x128xf32>
    %c0_45 = arith.constant 0 : index
    %c0_46 = arith.constant 0 : index
    %59 = vector.load %arg14[%c0_45, %c0_46] : memref<128x128xf32, #tpu.memory_space<vmem>>, vector<128x128xf32>
    %cst_47 = arith.constant dense<0.000000e+00> : vector<1x128xf32>
    %60 = tpu.matmul %58, %59, %cst_47 {dimension_numbers = #tpu.dot_dimension_numbers<[1], [0], [0], [1], [0, 0, 1, 1], [], []>} : vector<1x128xf32>, vector<128x128xf32>, vector<1x128xf32> -> vector<1x128xf32>
    %c0_48 = arith.constant 0 : index
    %c0_49 = arith.constant 0 : index
    %61 = vector.load %arg15[%c0_48, %c0_49] : memref<1x128xf32, #tpu.memory_space<vmem>>, vector<1x128xf32>
    %62 = arith.addf %60, %61 : vector<1x128xf32>
    %c0_50 = arith.constant 0 : index
    %c0_51 = arith.constant 0 : index
    %c0_52 = arith.constant 0 : index
    %63 = vector.load %arg16[%c0_50, %c0_51, %c0_52] : memref<1x1x128xf32, #tpu.memory_space<vmem>>, vector<1x1x128xf32>
    %64 = vector.shape_cast %63 : vector<1x1x128xf32> to vector<1x128xf32>
    %65 = vector.shape_cast %62 : vector<1x128xf32> to vector<1x1x128xf32>
    tpu.vector_store %arg16[%c0_50, %c0_51, %c0_52], %65 {strides = array<i32>} : memref<1x1x128xf32, #tpu.memory_space<vmem>>, vector<1x1x128xf32>,
    return
  }
  func.func @transform_0(%arg0: i32) -> (i32, i32, i32) {
    %c0_i32 = arith.constant 0 : i32
    %c0_i32_0 = arith.constant 0 : i32
    %c0_i32_1 = arith.constant 0 : i32
    return %arg0, %c0_i32, %c0_i32_0 : i32, i32, i32
  }
  func.func @transform_1(%arg0: i32) -> (i32, i32) {
    %c0_i32 = arith.constant 0 : i32
    %c0_i32_0 = arith.constant 0 : i32
    %c0_i32_1 = arith.constant 0 : i32
    return %c0_i32, %c0_i32_0 : i32, i32
  }
  func.func @transform_2(%arg0: i32) -> (i32, i32) {
    %c0_i32 = arith.constant 0 : i32
    %c0_i32_0 = arith.constant 0 : i32
    %c0_i32_1 = arith.constant 0 : i32
    return %c0_i32, %c0_i32_0 : i32, i32
  }
  func.func @transform_3(%arg0: i32) -> (i32, i32, i32) {
    %c0_i32 = arith.constant 0 : i32
    %c0_i32_0 = arith.constant 0 : i32
    %c0_i32_1 = arith.constant 0 : i32
    return %arg0, %c0_i32, %c0_i32_0 : i32, i32, i32
  }
  func.func @transform_4(%arg0: i32) -> (i32, i32, i32) {
    %c0_i32 = arith.constant 0 : i32
    %c0_i32_0 = arith.constant 0 : i32
    %c0_i32_1 = arith.constant 0 : i32
    return %arg0, %c0_i32, %c0_i32_0 : i32, i32, i32
  }
  func.func @transform_5(%arg0: i32) -> (i32, i32, i32) {
    %c0_i32 = arith.constant 0 : i32
    %c0_i32_0 = arith.constant 0 : i32
    %c0_i32_1 = arith.constant 0 : i32
    return %arg0, %c0_i32, %c0_i32_0 : i32, i32, i32
  }
  func.func @transform_6(%arg0: i32) -> (i32, i32, i32) {
    %c0_i32 = arith.constant 0 : i32
    %c0_i32_0 = arith.constant 0 : i32
    %c0_i32_1 = arith.constant 0 : i32
    return %arg0, %c0_i32, %c0_i32_0 : i32, i32, i32
  }
  func.func @transform_7(%arg0: i32) -> (i32, i32) {
    %c0_i32 = arith.constant 0 : i32
    %c0_i32_0 = arith.constant 0 : i32
    %c0_i32_1 = arith.constant 0 : i32
    return %c0_i32, %c0_i32_0 : i32, i32
  }
  func.func @transform_8(%arg0: i32) -> (i32, i32) {
    %c0_i32 = arith.constant 0 : i32
    %c0_i32_0 = arith.constant 0 : i32
    %c0_i32_1 = arith.constant 0 : i32
    return %c0_i32, %c0_i32_0 : i32, i32
  }
  func.func @transform_9(%arg0: i32) -> (i32, i32) {
    %c0_i32 = arith.constant 0 : i32
    %c0_i32_0 = arith.constant 0 : i32
    %c0_i32_1 = arith.constant 0 : i32
    return %c0_i32, %c0_i32_0 : i32, i32
  }
  func.func @transform_10(%arg0: i32) -> (i32, i32) {
    %c0_i32 = arith.constant 0 : i32
    %c0_i32_0 = arith.constant 0 : i32
    %c0_i32_1 = arith.constant 0 : i32
    return %c0_i32, %c0_i32_0 : i32, i32
  }
  func.func @transform_11(%arg0: i32) -> (i32, i32) {
    %c0_i32 = arith.constant 0 : i32
    %c0_i32_0 = arith.constant 0 : i32
    %c0_i32_1 = arith.constant 0 : i32
    return %c0_i32, %c0_i32_0 : i32, i32
  }
  func.func @transform_12(%arg0: i32) -> (i32, i32) {
    %c0_i32 = arith.constant 0 : i32
    %c0_i32_0 = arith.constant 0 : i32
    %c0_i32_1 = arith.constant 0 : i32
    return %c0_i32, %c0_i32_0 : i32, i32
  }
  func.func @transform_13(%arg0: i32) -> (i32, i32) {
    %c0_i32 = arith.constant 0 : i32
    %c0_i32_0 = arith.constant 0 : i32
    %c0_i32_1 = arith.constant 0 : i32
    return %c0_i32, %c0_i32_0 : i32, i32
  }
  func.func @transform_14(%arg0: i32) -> (i32, i32) {
    %c0_i32 = arith.constant 0 : i32
    %c0_i32_0 = arith.constant 0 : i32
    %c0_i32_1 = arith.constant 0 : i32
    return %c0_i32, %c0_i32_0 : i32, i32
  }
  func.func @transform_15(%arg0: i32) -> (i32, i32, i32) {
    %c0_i32 = arith.constant 0 : i32
    %c0_i32_0 = arith.constant 0 : i32
    %c0_i32_1 = arith.constant 0 : i32
    return %arg0, %c0_i32, %c0_i32_0 : i32, i32, i32
  }
}

</mosaic_0001>

<llo_original>
// kernel: type_classifier_forward.1
$region0: #{type_classifier_forward.1}
  #allocation0 [shape = 'u32[]', space=smem, size = 0x4, offset = 0x4, fixed_abs, tag = 'smem constant byte address 0x4 - core index']
  #allocation1 [shape = 'u32[144,128]{1,0:T(1,128)}', space=vmem, size = 0x12000, scoped, tag = 'internal scratch']
  %s0 = inlined_call_operand.vmem [shape: f32[2,8,24], index: 0, kind: input, shape index: {}]
  %s1 = inlined_call_operand.vmem [shape: f32[24,32], index: 1, kind: input, shape index: {}]
  %s2 = inlined_call_operand.vmem [shape: f32[1,32], index: 2, kind: input, shape index: {}]
  %s3 = inlined_call_operand.vmem [shape: f32[2,8,16], index: 3, kind: input, shape index: {}]
  %s4 = inlined_call_operand.vmem [shape: f32[2,8,8], index: 4, kind: input, shape index: {}]
  %s5 = inlined_call_operand.vmem [shape: f32[2,8,1], index: 5, kind: input, shape index: {}]
  %s6 = inlined_call_operand.vmem [shape: f32[2,8,1], index: 6, kind: input, shape index: {}]
  %s7 = inlined_call_operand.vmem [shape: f32[16,32], index: 7, kind: input, shape index: {}]
  %s8 = inlined_call_operand.vmem [shape: f32[1,32], index: 8, kind: input, shape index: {}]
  %s9 = inlined_call_operand.vmem [shape: f32[32,32], index: 9, kind: input, shape index: {}]
  %s10 = inlined_call_operand.vmem [shape: f32[1,32], index: 10, kind: input, shape index: {}]
  %s11 = inlined_call_operand.vmem [shape: f32[32,128], index: 11, kind: input, shape index: {}]
  %s12 = inlined_call_operand.vmem [shape: f32[1,128], index: 12, kind: input, shape index: {}]
  %s13 = inlined_call_operand.vmem [shape: f32[128,128], index: 13, kind: input, shape index: {}]
  %s14 = inlined_call_operand.vmem [shape: f32[1,128], index: 14, kind: input, shape index: {}]
  %s15 = inlined_call_operand.hbm [shape: f32[2,1,128], index: 15, kind: output, shape index: {}]
  %s16 = sld [smem:[#allocation0]]
  $region93: #{type_classifier_forward.1} parent=0
    _
  %s18 = ssub.s32 1, %s16
  %s19 = scalar_select 0, %s18, %s16
  $region1: #{type_classifier_forward.1} parent=0
    #allocation2 [shape = 'u8[1024]{0}', space=vmem, size = 0x400, scoped, tag = 'output window, operand 0']
    #allocation3 [shape = 's32[2]{0}', space=sflag, size = 0x8, scoped, tag = 'scoped memory for type_classifier_forward.1']
    %20 = vsyncpa [#allocation3], 0
    %s21 = scalar_lea.sflag [#allocation3], 1
    %22 = vsyncpa %s21, 0
    loop: start=0, step=1, limit=4
    $region2: #{type_classifier_forward.1} parent=1 // loop_pre_header
      _
    $region3: #{type_classifier_forward.1} parent=1 // loop_header
      %s24 = sphi 0, %s28
      %p25 = scmp.ge.s32.totalorder %s24, 4
      %s34 = sphi 0, %s36
      %s37 = sphi 0, %s34
      %s38 = sphi 0, %s37
      %s54 = sphi 0, %s38
      %s58 = sphi 0, %s58
      %s60 = sphi 0, %s58
      %s61 = sphi 0, %s60
      %s75 = sphi 0, %s61
      %s79 = sphi 0, %s79
      %s81 = sphi 0, %s79
      %s82 = sphi 0, %s81
      %s96 = sphi 0, %s82
      %s102 = sphi 0, %s104
      %s105 = sphi 0, %s102
      %s106 = sphi 0, %s105
      %s122 = sphi 0, %s106
      %s128 = sphi 0, %s130
      %s131 = sphi 0, %s128
      %s132 = sphi 0, %s131
      %s148 = sphi 0, %s132
      %s154 = sphi 0, %s156
      %s157 = sphi 0, %s154
      %s158 = sphi 0, %s157
      %s174 = sphi 0, %s158
      %s180 = sphi 0, %s182
      %s183 = sphi 0, %s180
      %s184 = sphi 0, %s183
      %s200 = sphi 0, %s184
      %s204 = sphi 0, %s204
      %s206 = sphi 0, %s204
      %s207 = sphi 0, %s206
      %s221 = sphi 0, %s207
      %s225 = sphi 0, %s225
      %s227 = sphi 0, %s225
      %s228 = sphi 0, %s227
      %s242 = sphi 0, %s228
      %s246 = sphi 0, %s246
      %s248 = sphi 0, %s246
      %s249 = sphi 0, %s248
      %s263 = sphi 0, %s249
      %s267 = sphi 0, %s267
      %s269 = sphi 0, %s267
      %s270 = sphi 0, %s269
      %s284 = sphi 0, %s270
      %s288 = sphi 0, %s288
      %s290 = sphi 0, %s288
      %s291 = sphi 0, %s290
      %s305 = sphi 0, %s291
      %s309 = sphi 0, %s309
      %s311 = sphi 0, %s309
      %s312 = sphi 0, %s311
      %s326 = sphi 0, %s312
      %s330 = sphi 0, %s330
      %s332 = sphi 0, %s330
      %s333 = sphi 0, %s332
      %s347 = sphi 0, %s333
      %s351 = sphi 0, %s351
      %s353 = sphi 0, %s351
      %s354 = sphi 0, %s353
      %s368 = sphi 0, %s354
      %s374 = sphi 0, %s376
      %s377 = sphi 0, %s374
      %s378 = sphi 0, %s377
      %s394 = sphi 0, %s378
    $region4: #{type_classifier_forward.1} parent=1 // loop_header_branch
      %27 = sbr.rel (%p25) target = $region8
    $region5: #{type_classifier_forward.1} parent=1 // loop_body
      %s29 = ssub.s32 %s24, 1
      %s30 = ssub.s32 %s24, 2
      %s31 = sadd.s32 %s24, 1
      %s32 = ssub.s32 %s24, %s31
      %p33 = scmp.eq.s32.totalorder %s32, 0
      %s35 = sadd.s32 %s34, 1
      %s36 = scalar_select %p33, %s34, %s35
      %p39 = pneg %p33
      %p40 = scmp.eq.s32.totalorder %s24, 1
      %p41 = por %p39, %p40
      %p42 = scmp.ne.s32.totalorder %s34, %s37
      %p43 = scmp.eq.s32.totalorder %s24, 0
      %p44 = por %p42, %p43
      %p45 = scmp.ne.s32.totalorder %s34, %s37
      %p46 = scmp.eq.s32.totalorder %s29, 1
      %p47 = por %p45, %p46
      %p48 = scmp.ne.s32.totalorder %s37, %s38
      %p49 = scmp.eq.s32.totalorder %s29, 0
      %p50 = por %p48, %p49
      %p51 = scmp.ne.s32.totalorder %s37, %s38
      %p52 = scmp.eq.s32.totalorder %s30, 1
      %p53 = por %p51, %p52
      %p55 = scmp.ne.s32.totalorder %s38, %s54
      %p56 = scmp.eq.s32.totalorder %s30, 0
      %p57 = por %p55, %p56
      %s59 = sadd.s32 %s58, 1
      %p62 = scmp.eq.s32.totalorder %s24, 1
      %p63 = scmp.ne.s32.totalorder %s58, %s60
      %p64 = scmp.eq.s32.totalorder %s24, 0
      %p65 = por %p63, %p64
      %p66 = scmp.ne.s32.totalorder %s58, %s60
      %p67 = scmp.eq.s32.totalorder %s29, 1
      %p68 = por %p66, %p67
      %p69 = scmp.ne.s32.totalorder %s60, %s61
      %p70 = scmp.eq.s32.totalorder %s29, 0
      %p71 = por %p69, %p70
      %p72 = scmp.ne.s32.totalorder %s60, %s61
      %p73 = scmp.eq.s32.totalorder %s30, 1
      %p74 = por %p72, %p73
      %p76 = scmp.ne.s32.totalorder %s61, %s75
      %p77 = scmp.eq.s32.totalorder %s30, 0
      %p78 = por %p76, %p77
      %s80 = sadd.s32 %s79, 1
      %p83 = scmp.eq.s32.totalorder %s24, 1
      %p84 = scmp.ne.s32.totalorder %s79, %s81
      %p85 = scmp.eq.s32.totalorder %s24, 0
      %p86 = por %p84, %p85
      %p87 = scmp.ne.s32.totalorder %s79, %s81
      %p88 = scmp.eq.s32.totalorder %s29, 1
      %p89 = por %p87, %p88
      %p90 = scmp.ne.s32.totalorder %s81, %s82
      %p91 = scmp.eq.s32.totalorder %s29, 0
      %p92 = por %p90, %p91
      %p93 = scmp.ne.s32.totalorder %s81, %s82
      %p94 = scmp.eq.s32.totalorder %s30, 1
      %p95 = por %p93, %p94
      %p97 = scmp.ne.s32.totalorder %s82, %s96
      %p98 = scmp.eq.s32.totalorder %s30, 0
      %p99 = por %p97, %p98
      %s100 = ssub.s32 %s24, %s31
      %p101 = scmp.eq.s32.totalorder %s100, 0
      %s103 = sadd.s32 %s102, 1
      %s104 = scalar_select %p101, %s102, %s103
      %p107 = pneg %p101
      %p108 = scmp.eq.s32.totalorder %s24, 1
      %p109 = por %p107, %p108
      %p110 = scmp.ne.s32.totalorder %s102, %s105
      %p111 = scmp.eq.s32.totalorder %s24, 0
      %p112 = por %p110, %p111
      %p113 = scmp.ne.s32.totalorder %s102, %s105
      %p114 = scmp.eq.s32.totalorder %s29, 1
      %p115 = por %p113, %p114
      %p116 = scmp.ne.s32.totalorder %s105, %s106
      %p117 = scmp.eq.s32.totalorder %s29, 0
      %p118 = por %p116, %p117
      %p119 = scmp.ne.s32.totalorder %s105, %s106
      %p120 = scmp.eq.s32.totalorder %s30, 1
      %p121 = por %p119, %p120
      %p123 = scmp.ne.s32.totalorder %s106, %s122
      %p124 = scmp.eq.s32.totalorder %s30, 0
      %p125 = por %p123, %p124
      %s126 = ssub.s32 %s24, %s31
      %p127 = scmp.eq.s32.totalorder %s126, 0
      %s129 = sadd.s32 %s128, 1
      %s130 = scalar_select %p127, %s128, %s129
      %p133 = pneg %p127
      %p134 = scmp.eq.s32.totalorder %s24, 1
      %p135 = por %p133, %p134
      %p136 = scmp.ne.s32.totalorder %s128, %s131
      %p137 = scmp.eq.s32.totalorder %s24, 0
      %p138 = por %p136, %p137
      %p139 = scmp.ne.s32.totalorder %s128, %s131
      %p140 = scmp.eq.s32.totalorder %s29, 1
      %p141 = por %p139, %p140
      %p142 = scmp.ne.s32.totalorder %s131, %s132
      %p143 = scmp.eq.s32.totalorder %s29, 0
      %p144 = por %p142, %p143
      %p145 = scmp.ne.s32.totalorder %s131, %s132
      %p146 = scmp.eq.s32.totalorder %s30, 1
      %p147 = por %p145, %p146
      %p149 = scmp.ne.s32.totalorder %s132, %s148
      %p150 = scmp.eq.s32.totalorder %s30, 0
      %p151 = por %p149, %p150
      %s152 = ssub.s32 %s24, %s31
      %p153 = scmp.eq.s32.totalorder %s152, 0
      %s155 = sadd.s32 %s154, 1
      %s156 = scalar_select %p153, %s154, %s155
      %p159 = pneg %p153
      %p160 = scmp.eq.s32.totalorder %s24, 1
      %p161 = por %p159, %p160
      %p162 = scmp.ne.s32.totalorder %s154, %s157
      %p163 = scmp.eq.s32.totalorder %s24, 0
      %p164 = por %p162, %p163
      %p165 = scmp.ne.s32.totalorder %s154, %s157
      %p166 = scmp.eq.s32.totalorder %s29, 1
      %p167 = por %p165, %p166
      %p168 = scmp.ne.s32.totalorder %s157, %s158
      %p169 = scmp.eq.s32.totalorder %s29, 0
      %p170 = por %p168, %p169
      %p171 = scmp.ne.s32.totalorder %s157, %s158
      %p172 = scmp.eq.s32.totalorder %s30, 1
      %p173 = por %p171, %p172
      %p175 = scmp.ne.s32.totalorder %s158, %s174
      %p176 = scmp.eq.s32.totalorder %s30, 0
      %p177 = por %p175, %p176
      %s178 = ssub.s32 %s24, %s31
      %p179 = scmp.eq.s32.totalorder %s178, 0
      %s181 = sadd.s32 %s180, 1
      %s182 = scalar_select %p179, %s180, %s181
      %p185 = pneg %p179
      %p186 = scmp.eq.s32.totalorder %s24, 1
      %p187 = por %p185, %p186
      %p188 = scmp.ne.s32.totalorder %s180, %s183
      %p189 = scmp.eq.s32.totalorder %s24, 0
      %p190 = por %p188, %p189
      %p191 = scmp.ne.s32.totalorder %s180, %s183
      %p192 = scmp.eq.s32.totalorder %s29, 1
      %p193 = por %p191, %p192
      %p194 = scmp.ne.s32.totalorder %s183, %s184
      %p195 = scmp.eq.s32.totalorder %s29, 0
      %p196 = por %p194, %p195
      %p197 = scmp.ne.s32.totalorder %s183, %s184
      %p198 = scmp.eq.s32.totalorder %s30, 1
      %p199 = por %p197, %p198
      %p201 = scmp.ne.s32.totalorder %s184, %s200
      %p202 = scmp.eq.s32.totalorder %s30, 0
      %p203 = por %p201, %p202
      %s205 = sadd.s32 %s204, 1
      %p208 = scmp.eq.s32.totalorder %s24, 1
      %p209 = scmp.ne.s32.totalorder %s204, %s206
      %p210 = scmp.eq.s32.totalorder %s24, 0
      %p211 = por %p209, %p210
      %p212 = scmp.ne.s32.totalorder %s204, %s206
      %p213 = scmp.eq.s32.totalorder %s29, 1
      %p214 = por %p212, %p213
      %p215 = scmp.ne.s32.totalorder %s206, %s207
      %p216 = scmp.eq.s32.totalorder %s29, 0
      %p217 = por %p215, %p216
      %p218 = scmp.ne.s32.totalorder %s206, %s207
      %p219 = scmp.eq.s32.totalorder %s30, 1
      %p220 = por %p218, %p219
      %p222 = scmp.ne.s32.totalorder %s207, %s221
      %p223 = scmp.eq.s32.totalorder %s30, 0
      %p224 = por %p222, %p223
      %s226 = sadd.s32 %s225, 1
      %p229 = scmp.eq.s32.totalorder %s24, 1
      %p230 = scmp.ne.s32.totalorder %s225, %s227
      %p231 = scmp.eq.s32.totalorder %s24, 0
      %p232 = por %p230, %p231
      %p233 = scmp.ne.s32.totalorder %s225, %s227
      %p234 = scmp.eq.s32.totalorder %s29, 1
      %p235 = por %p233, %p234
      %p236 = scmp.ne.s32.totalorder %s227, %s228
      %p237 = scmp.eq.s32.totalorder %s29, 0
      %p238 = por %p236, %p237
      %p239 = scmp.ne.s32.totalorder %s227, %s228
      %p240 = scmp.eq.s32.totalorder %s30, 1
      %p241 = por %p239, %p240
      %p243 = scmp.ne.s32.totalorder %s228, %s242
      %p244 = scmp.eq.s32.totalorder %s30, 0
      %p245 = por %p243, %p244
      %s247 = sadd.s32 %s246, 1
      %p250 = scmp.eq.s32.totalorder %s24, 1
      %p251 = scmp.ne.s32.totalorder %s246, %s248
      %p252 = scmp.eq.s32.totalorder %s24, 0
      %p253 = por %p251, %p252
      %p254 = scmp.ne.s32.totalorder %s246, %s248
      %p255 = scmp.eq.s32.totalorder %s29, 1
      %p256 = por %p254, %p255
      %p257 = scmp.ne.s32.totalorder %s248, %s249
      %p258 = scmp.eq.s32.totalorder %s29, 0
      %p259 = por %p257, %p258
      %p260 = scmp.ne.s32.totalorder %s248, %s249
      %p261 = scmp.eq.s32.totalorder %s30, 1
      %p262 = por %p260, %p261
      %p264 = scmp.ne.s32.totalorder %s249, %s263
      %p265 = scmp.eq.s32.totalorder %s30, 0
      %p266 = por %p264, %p265
      %s268 = sadd.s32 %s267, 1
      %p271 = scmp.eq.s32.totalorder %s24, 1
      %p272 = scmp.ne.s32.totalorder %s267, %s269
      %p273 = scmp.eq.s32.totalorder %s24, 0
      %p274 = por %p272, %p273
      %p275 = scmp.ne.s32.totalorder %s267, %s269
      %p276 = scmp.eq.s32.totalorder %s29, 1
      %p277 = por %p275, %p276
      %p278 = scmp.ne.s32.totalorder %s269, %s270
      %p279 = scmp.eq.s32.totalorder %s29, 0
      %p280 = por %p278, %p279
      %p281 = scmp.ne.s32.totalorder %s269, %s270
      %p282 = scmp.eq.s32.totalorder %s30, 1
      %p283 = por %p281, %p282
      %p285 = scmp.ne.s32.totalorder %s270, %s284
      %p286 = scmp.eq.s32.totalorder %s30, 0
      %p287 = por %p285, %p286
      %s289 = sadd.s32 %s288, 1
      %p292 = scmp.eq.s32.totalorder %s24, 1
      %p293 = scmp.ne.s32.totalorder %s288, %s290
      %p294 = scmp.eq.s32.totalorder %s24, 0
      %p295 = por %p293, %p294
      %p296 = scmp.ne.s32.totalorder %s288, %s290
      %p297 = scmp.eq.s32.totalorder %s29, 1
      %p298 = por %p296, %p297
      %p299 = scmp.ne.s32.totalorder %s290, %s291
      %p300 = scmp.eq.s32.totalorder %s29, 0
      %p301 = por %p299, %p300
      %p302 = scmp.ne.s32.totalorder %s290, %s291
      %p303 = scmp.eq.s32.totalorder %s30, 1
      %p304 = por %p302, %p303
      %p306 = scmp.ne.s32.totalorder %s291, %s305
      %p307 = scmp.eq.s32.totalorder %s30, 0
      %p308 = por %p306, %p307
      %s310 = sadd.s32 %s309, 1
      %p313 = scmp.eq.s32.totalorder %s24, 1
      %p314 = scmp.ne.s32.totalorder %s309, %s311
      %p315 = scmp.eq.s32.totalorder %s24, 0
      %p316 = por %p314, %p315
      %p317 = scmp.ne.s32.totalorder %s309, %s311
      %p318 = scmp.eq.s32.totalorder %s29, 1
      %p319 = por %p317, %p318
      %p320 = scmp.ne.s32.totalorder %s311, %s312
      %p321 = scmp.eq.s32.totalorder %s29, 0
      %p322 = por %p320, %p321
      %p323 = scmp.ne.s32.totalorder %s311, %s312
      %p324 = scmp.eq.s32.totalorder %s30, 1
      %p325 = por %p323, %p324
      %p327 = scmp.ne.s32.totalorder %s312, %s326
      %p328 = scmp.eq.s32.totalorder %s30, 0
      %p329 = por %p327, %p328
      %s331 = sadd.s32 %s330, 1
      %p334 = scmp.eq.s32.totalorder %s24, 1
      %p335 = scmp.ne.s32.totalorder %s330, %s332
      %p336 = scmp.eq.s32.totalorder %s24, 0
      %p337 = por %p335, %p336
      %p338 = scmp.ne.s32.totalorder %s330, %s332
      %p339 = scmp.eq.s32.totalorder %s29, 1
      %p340 = por %p338, %p339
      %p341 = scmp.ne.s32.totalorder %s332, %s333
      %p342 = scmp.eq.s32.totalorder %s29, 0
      %p343 = por %p341, %p342
      %p344 = scmp.ne.s32.totalorder %s332, %s333
      %p345 = scmp.eq.s32.totalorder %s30, 1
      %p346 = por %p344, %p345
      %p348 = scmp.ne.s32.totalorder %s333, %s347
      %p349 = scmp.eq.s32.totalorder %s30, 0
      %p350 = por %p348, %p349
      %s352 = sadd.s32 %s351, 1
      %p355 = scmp.eq.s32.totalorder %s24, 1
      %p356 = scmp.ne.s32.totalorder %s351, %s353
      %p357 = scmp.eq.s32.totalorder %s24, 0
      %p358 = por %p356, %p357
      %p359 = scmp.ne.s32.totalorder %s351, %s353
      %p360 = scmp.eq.s32.totalorder %s29, 1
      %p361 = por %p359, %p360
      %p362 = scmp.ne.s32.totalorder %s353, %s354
      %p363 = scmp.eq.s32.totalorder %s29, 0
      %p364 = por %p362, %p363
      %p365 = scmp.ne.s32.totalorder %s353, %s354
      %p366 = scmp.eq.s32.totalorder %s30, 1
      %p367 = por %p365, %p366
      %p369 = scmp.ne.s32.totalorder %s354, %s368
      %p370 = scmp.eq.s32.totalorder %s30, 0
      %p371 = por %p369, %p370
      %s372 = ssub.s32 %s24, %s31
      %p373 = scmp.eq.s32.totalorder %s372, 0
      %s375 = sadd.s32 %s374, 1
      %s376 = scalar_select %p373, %s374, %s375
      %p379 = pneg %p373
      %p380 = scmp.eq.s32.totalorder %s24, 1
      %p381 = por %p379, %p380
      %p382 = scmp.ne.s32.totalorder %s374, %s377
      %p383 = scmp.eq.s32.totalorder %s24, 0
      %p384 = por %p382, %p383
      %p385 = scmp.ne.s32.totalorder %s374, %s377
      %p386 = scmp.eq.s32.totalorder %s29, 1
      %p387 = por %p385, %p386
      %p388 = scmp.ne.s32.totalorder %s377, %s378
      %p389 = scmp.eq.s32.totalorder %s29, 0
      %p390 = por %p388, %p389
      %p391 = scmp.ne.s32.totalorder %s377, %s378
      %p392 = scmp.eq.s32.totalorder %s30, 1
      %p393 = por %p391, %p392
      %p395 = scmp.ne.s32.totalorder %s378, %s394
      %p396 = scmp.eq.s32.totalorder %s30, 0
      %p397 = por %p395, %p396
      %p398 = scmp.le.s32.totalorder 1, %s24
      %p399 = scmp.lt.s32.totalorder %s24, 3
      %p400 = pnand %p398, %p399
      %p401 = pneg %p400
      // Predicated region
      $region9: #{type_classifier_forward.1} parent=5 // pred_check
        _
      $region10: #{type_classifier_forward.1} parent=5 // pred_check_branch
        %403 = sbr.rel (%p400) target = $region12
      $region11: #{type_classifier_forward.1} parent=5 // pred_region
        %s404 = ssub.s32 %s24, 1
        // Predicated region
        $region13: #{type_classifier_forward.1} parent=11 // pred_check
          %p405 = pneg %p71
        $region14: #{type_classifier_forward.1} parent=11 // pred_check_branch
          %407 = sbr.rel (%p405) target = $region16
        $region15: #{type_classifier_forward.1} parent=11 // pred_region
          _
        $region16: #{type_classifier_forward.1} parent=11 // pred_fallthru
          _
        // Predicated region
        $region17: #{type_classifier_forward.1} parent=11 // pred_check
          %p408 = pneg %p92
        $region18: #{type_classifier_forward.1} parent=11 // pred_check_branch
          %410 = sbr.rel (%p408) target = $region20
        $region19: #{type_classifier_forward.1} parent=11 // pred_region
          _
        $region20: #{type_classifier_forward.1} parent=11 // pred_fallthru
          _
        // Predicated region
        $region21: #{type_classifier_forward.1} parent=11 // pred_check
          %p411 = pneg %p217
        $region22: #{type_classifier_forward.1} parent=11 // pred_check_branch
          %413 = sbr.rel (%p411) target = $region24
        $region23: #{type_classifier_forward.1} parent=11 // pred_region
          _
        $region24: #{type_classifier_forward.1} parent=11 // pred_fallthru
          _
        // Predicated region
        $region25: #{type_classifier_forward.1} parent=11 // pred_check
          %p414 = pneg %p238
        $region26: #{type_classifier_forward.1} parent=11 // pred_check_branch
          %416 = sbr.rel (%p414) target = $region28
        $region27: #{type_classifier_forward.1} parent=11 // pred_region
          _
        $region28: #{type_classifier_forward.1} parent=11 // pred_fallthru
          _
        // Predicated region
        $region29: #{type_classifier_forward.1} parent=11 // pred_check
          %p417 = pneg %p259
        $region30: #{type_classifier_forward.1} parent=11 // pred_check_branch
          %419 = sbr.rel (%p417) target = $region32
        $region31: #{type_classifier_forward.1} parent=11 // pred_region
          _
        $region32: #{type_classifier_forward.1} parent=11 // pred_fallthru
          _
        // Predicated region
        $region33: #{type_classifier_forward.1} parent=11 // pred_check
          %p420 = pneg %p280
        $region34: #{type_classifier_forward.1} parent=11 // pred_check_branch
          %422 = sbr.rel (%p420) target = $region36
        $region35: #{type_classifier_forward.1} parent=11 // pred_region
          _
        $region36: #{type_classifier_forward.1} parent=11 // pred_fallthru
          _
        // Predicated region
        $region37: #{type_classifier_forward.1} parent=11 // pred_check
          %p423 = pneg %p301
        $region38: #{type_classifier_forward.1} parent=11 // pred_check_branch
          %425 = sbr.rel (%p423) target = $region40
        $region39: #{type_classifier_forward.1} parent=11 // pred_region
          _
        $region40: #{type_classifier_forward.1} parent=11 // pred_fallthru
          _
        // Predicated region
        $region41: #{type_classifier_forward.1} parent=11 // pred_check
          %p426 = pneg %p322
        $region42: #{type_classifier_forward.1} parent=11 // pred_check_branch
          %428 = sbr.rel (%p426) target = $region44
        $region43: #{type_classifier_forward.1} parent=11 // pred_region
          _
        $region44: #{type_classifier_forward.1} parent=11 // pred_fallthru
          _
        // Predicated region
        $region45: #{type_classifier_forward.1} parent=11 // pred_check
          %p429 = pneg %p343
        $region46: #{type_classifier_forward.1} parent=11 // pred_check_branch
          %431 = sbr.rel (%p429) target = $region48
        $region47: #{type_classifier_forward.1} parent=11 // pred_region
          _
        $region48: #{type_classifier_forward.1} parent=11 // pred_fallthru
          _
        // Predicated region
        $region49: #{type_classifier_forward.1} parent=11 // pred_check
          %p432 = pneg %p364
        $region50: #{type_classifier_forward.1} parent=11 // pred_check_branch
          %434 = sbr.rel (%p432) target = $region52
        $region51: #{type_classifier_forward.1} parent=11 // pred_region
          _
        $region52: #{type_classifier_forward.1} parent=11 // pred_fallthru
          _
      $region12: #{type_classifier_forward.1} parent=5 // pred_fallthru
        _
      %p435 = scmp.lt.s32.totalorder %s24, 2
      // Predicated region
      $region53: #{type_classifier_forward.1} parent=5 // pred_check
        %p436 = pneg %p435
      $region54: #{type_classifier_forward.1} parent=5 // pred_check_branch
        %438 = sbr.rel (%p436) target = $region56
      $region55: #{type_classifier_forward.1} parent=5 // pred_region
        // Predicated region
        $region57: #{type_classifier_forward.1} parent=55 // pred_check
          %p439 = pneg %p44
        $region58: #{type_classifier_forward.1} parent=55 // pred_check_branch
          %441 = sbr.rel (%p439) target = $region60
        $region59: #{type_classifier_forward.1} parent=55 // pred_region
          %p442 = scmp.lt.s32.totalorder %s24, 1
          %s443 = scalar_select %p442, %s24, 1
          %s444 = smul.addr %s443, 8
          %s445 = scalar_lea.vmem %s0, %s444
        $region60: #{type_classifier_forward.1} parent=55 // pred_fallthru
          _
        // Predicated region
        $region61: #{type_classifier_forward.1} parent=55 // pred_check
          %p446 = pneg %p112
        $region62: #{type_classifier_forward.1} parent=55 // pred_check_branch
          %448 = sbr.rel (%p446) target = $region64
        $region63: #{type_classifier_forward.1} parent=55 // pred_region
          %p449 = scmp.lt.s32.totalorder %s24, 1
          %s450 = scalar_select %p449, %s24, 1
          %s451 = smul.addr %s450, 8
          %s452 = scalar_lea.vmem %s3, %s451
        $region64: #{type_classifier_forward.1} parent=55 // pred_fallthru
          _
        // Predicated region
        $region65: #{type_classifier_forward.1} parent=55 // pred_check
          %p453 = pneg %p138
        $region66: #{type_classifier_forward.1} parent=55 // pred_check_branch
          %455 = sbr.rel (%p453) target = $region68
        $region67: #{type_classifier_forward.1} parent=55 // pred_region
          %p456 = scmp.lt.s32.totalorder %s24, 1
          %s457 = scalar_select %p456, %s24, 1
          %s458 = smul.addr %s457, 8
          %s459 = scalar_lea.vmem %s4, %s458
        $region68: #{type_classifier_forward.1} parent=55 // pred_fallthru
          _
        // Predicated region
        $region69: #{type_classifier_forward.1} parent=55 // pred_check
          %p460 = pneg %p164
        $region70: #{type_classifier_forward.1} parent=55 // pred_check_branch
          %462 = sbr.rel (%p460) target = $region72
        $region71: #{type_classifier_forward.1} parent=55 // pred_region
          %p463 = scmp.lt.s32.totalorder %s24, 1
          %s464 = scalar_select %p463, %s24, 1
          %s465 = smul.addr %s464, 8
          %s466 = scalar_lea.vmem %s5, %s465
        $region72: #{type_classifier_forward.1} parent=55 // pred_fallthru
          _
        // Predicated region
        $region73: #{type_classifier_forward.1} parent=55 // pred_check
          %p467 = pneg %p190
        $region74: #{type_classifier_forward.1} parent=55 // pred_check_branch
          %469 = sbr.rel (%p467) target = $region76
        $region75: #{type_classifier_forward.1} parent=55 // pred_region
          %p470 = scmp.lt.s32.totalorder %s24, 1
          %s471 = scalar_select %p470, %s24, 1
          %s472 = smul.addr %s471, 8
          %s473 = scalar_lea.vmem %s6, %s472
        $region76: #{type_classifier_forward.1} parent=55 // pred_fallthru
          _
      $region56: #{type_classifier_forward.1} parent=5 // pred_fallthru
        _
      %p474 = scmp.le.s32.totalorder 1, %s24
      %p475 = scmp.lt.s32.totalorder %s24, 3
      %p476 = pnand %p474, %p475
      %p477 = pneg %p476
      // Predicated region
      $region77: #{type_classifier_forward.1} parent=5 // pred_check
        _
      $region78: #{type_classifier_forward.1} parent=5 // pred_check_branch
        %479 = sbr.rel (%p476) target = $region80
      $region79: #{type_classifier_forward.1} parent=5 // pred_region
        %s480 = ssub.s32 %s24, 1
        %p481 = scmp.lt.s32.totalorder %s29, 1
        %s482 = scalar_select %p481, %s29, 1
        %s483 = smul.addr %s482, 8
        %s484 = scalar_lea.vmem %s0, %s483
        %p485 = pneg %p50
        %p486 = pneg %p47
        %p487 = pneg %p71
        %p488 = pneg %p68
        %p489 = pneg %p92
        %p490 = pneg %p89
        %p491 = scmp.lt.s32.totalorder %s29, 1
        %s492 = scalar_select %p491, %s29, 1
        %s493 = smul.addr %s492, 8
        %s494 = scalar_lea.vmem %s3, %s493
        %p495 = pneg %p118
        %p496 = pneg %p115
        %p497 = scmp.lt.s32.totalorder %s29, 1
        %s498 = scalar_select %p497, %s29, 1
        %s499 = smul.addr %s498, 8
        %s500 = scalar_lea.vmem %s4, %s499
        %p501 = pneg %p144
        %p502 = pneg %p141
        %p503 = scmp.lt.s32.totalorder %s29, 1
        %s504 = scalar_select %p503, %s29, 1
        %s505 = smul.addr %s504, 8
        %s506 = scalar_lea.vmem %s5, %s505
        %p507 = pneg %p170
        %p508 = pneg %p167
        %p509 = scmp.lt.s32.totalorder %s29, 1
        %s510 = scalar_select %p509, %s29, 1
        %s511 = smul.addr %s510, 8
        %s512 = scalar_lea.vmem %s6, %s511
        %p513 = pneg %p196
        %p514 = pneg %p193
        %p515 = pneg %p217
        %p516 = pneg %p214
        %p517 = pneg %p238
        %p518 = pneg %p235
        %p519 = pneg %p259
        %p520 = pneg %p256
        %p521 = pneg %p280
        %p522 = pneg %p277
        %p523 = pneg %p301
        %p524 = pneg %p298
        %p525 = pneg %p322
        %p526 = pneg %p319
        %p527 = pneg %p343
        %p528 = pneg %p340
        %p529 = pneg %p364
        %p530 = pneg %p361
        %p531 = pneg %p390
        %p532 = pneg %p387
        %s533 = sand.u32 %s377, 1
        %s534 = scalar_lea.sflag [#allocation3], %s533
        %s535 = sand.u32 %s377, 1
        %s536 = scalar_lea.vmem [#allocation2], %s535
        %p537 = scmp.lt.s32.totalorder %s29, 1
        %s538 = scalar_select %p537, %s29, 1
        %s539 = smul.addr %s538, 8
        %s540 = scalar_lea.vmem %s0, %s539
        %p541 = scmp.lt.s32.totalorder %s29, 1
        %s542 = scalar_select %p541, %s29, 1
        %s543 = smul.addr %s542, 8
        %s544 = scalar_lea.vmem %s3, %s543
        %p545 = scmp.lt.s32.totalorder %s29, 1
        %s546 = scalar_select %p545, %s29, 1
        %s547 = smul.addr %s546, 8
        %s548 = scalar_lea.vmem %s4, %s547
        %p549 = scmp.lt.s32.totalorder %s29, 1
        %s550 = scalar_select %p549, %s29, 1
        %s551 = smul.addr %s550, 8
        %s552 = scalar_lea.vmem %s5, %s551
        %p553 = scmp.lt.s32.totalorder %s29, 1
        %s554 = scalar_select %p553, %s29, 1
        %s555 = smul.addr %s554, 8
        %s556 = scalar_lea.vmem %s6, %s555
        %v557 = vld [vmem:[%s540] sm:$0xff]
        %v558 = vld [vmem:[%s1] sm:$0xff]
        %v559 = vld [vmem:[%s1 + $0x8] sm:$0xff]
        %v560 = vld [vmem:[%s1 + $0x10] sm:$0xff]
        %v561 = vld [vmem:[%s2] sm:$0x1]
        %v563 = vlaneseq
        %v564 = vshrl.u32 %v563, 7
        %v565 = vsub.s32 0, %v564
        %v566 = vrot.slane %v561, %v565
        %vm568 = vcmask 195584
        %v570 = vsel %vm568, %v557, 0
        %572 = vmatprep.subr.mxu0 0.0
        %573 = vmatpush1.msra.mxu0 0.0
        %574 = vmatprep.subr.mxu0 0.0
        %575 = vmatpush1.msra.mxu0 0.0
        %576 = vmatprep.subr.mxu0 0.0
        %577 = vmatpush1.msra.mxu0 0.0
        %578 = vmatprep.subr.mxu0 0.0
        %579 = vmatpush1.msra.mxu0 0.0
        %580 = vmatprep.subr.mxu0 0.0
        %581 = vmatpush1.msra.mxu0 0.0
        %582 = vmatprep.subr.mxu0 0.0
        %583 = vmatpush1.msra.mxu0 0.0
        %584 = vmatprep.subr.mxu0 0.0
        %585 = vmatpush1.msra.mxu0 0.0
        %586 = vmatprep.subr.mxu0 0.0
        %587 = vmatpush1.msra.mxu0 0.0
        %588 = vmatprep.subr.mxu0 0.0
        %589 = vmatpush1.msra.mxu0 0.0
        %590 = vmatprep.subr.mxu0 0.0
        %591 = vmatpush1.msra.mxu0 0.0
        %592 = vmatprep.subr.mxu0 0.0
        %593 = vmatpush1.msra.mxu0 0.0
        %594 = vmatprep.subr.mxu0 0.0
        %595 = vmatpush1.msra.mxu0 0.0
        %596 = vmatprep.subr.mxu0 0.0
        %597 = vmatpush1.msra.mxu0 0.0
        %598 = vmatprep.subr.mxu0 0.0
        %599 = vmatpush1.msra.mxu0 %v560
        %600 = vmatprep.subr.mxu0 0.0
        %601 = vmatpush1.msra.mxu0 %v559
        %602 = vmatprep.subr.mxu0 0.0
        %603 = vmatpush1.msra.mxu0 %v558
        %604 = vmatprep.subr.mxu0 0.0
        %605 = vmatpush2.msra.mxu0 0.0
        %606 = vmatprep.subr.mxu0 0.0
        %607 = vmatpush2.msra.mxu0 0.0
        %608 = vmatprep.subr.mxu0 0.0
        %609 = vmatpush2.msra.mxu0 0.0
        %610 = vmatprep.subr.mxu0 0.0
        %611 = vmatpush2.msra.mxu0 0.0
        %612 = vmatprep.subr.mxu0 0.0
        %613 = vmatpush2.msra.mxu0 0.0
        %614 = vmatprep.subr.mxu0 0.0
        %615 = vmatpush2.msra.mxu0 0.0
        %616 = vmatprep.subr.mxu0 0.0
        %617 = vmatpush2.msra.mxu0 0.0
        %618 = vmatprep.subr.mxu0 0.0
        %619 = vmatpush2.msra.mxu0 0.0
        %620 = vmatprep.subr.mxu0 0.0
        %621 = vmatpush2.msra.mxu0 0.0
        %622 = vmatprep.subr.mxu0 0.0
        %623 = vmatpush2.msra.mxu0 0.0
        %624 = vmatprep.subr.mxu0 0.0
        %625 = vmatpush2.msra.mxu0 0.0
        %626 = vmatprep.subr.mxu0 0.0
        %627 = vmatpush2.msra.mxu0 0.0
        %628 = vmatprep.subr.mxu0 0.0
        %629 = vmatpush2.msra.mxu0 0.0
        %630 = vmatprep.subr.mxu0 0.0
        %631 = vmatpush2.msra.mxu0 0.0
        %632 = vmatprep.subr.mxu0 0.0
        %633 = vmatpush2.msra.mxu0 0.0
        %634 = vmatprep.subr.mxu0 0.0
        %635 = vmatpush2.msra.mxu0 0.0
        %636 = vmatprep.mubr.f32.mxu0 0.0
        %637 = vmatmul.mubr.f32.gmra.mxu0 %v570
        %v638 = vpop.f32.mrf.mxu0
        %v639 = vadd.f32 %v566, %v638
        %v640 = vpop.f32.mrf.mxu0
        %641 = vdwg.mxu0
        %v642 = vtanh.pop %v639
        %v643 = vld [vmem:[%s548] sm:$0xff]
        %v644 = vld [vmem:[%s544] sm:$0xff]
        %v645 = vld [vmem:[%s7] sm:$0xff]
        %v646 = vld [vmem:[%s7 + $0x8] sm:$0xff]
        %vm647 = vcmask 130048
        %v649 = vsel %vm647, %v644, 0
        %651 = vmatprep.subr.mxu0 0.0
        %652 = vmatpush1.msra.mxu0 0.0
        %653 = vmatprep.subr.mxu0 0.0
        %654 = vmatpush1.msra.mxu0 0.0
        %655 = vmatprep.subr.mxu0 0.0
        %656 = vmatpush1.msra.mxu0 0.0
        %657 = vmatprep.subr.mxu0 0.0
        %658 = vmatpush1.msra.mxu0 0.0
        %659 = vmatprep.subr.mxu0 0.0
        %660 = vmatpush1.msra.mxu0 0.0
        %661 = vmatprep.subr.mxu0 0.0
        %662 = vmatpush1.msra.mxu0 0.0
        %663 = vmatprep.subr.mxu0 0.0
        %664 = vmatpush1.msra.mxu0 0.0
        %665 = vmatprep.subr.mxu0 0.0
        %666 = vmatpush1.msra.mxu0 0.0
        %667 = vmatprep.subr.mxu0 0.0
        %668 = vmatpush1.msra.mxu0 0.0
        %669 = vmatprep.subr.mxu0 0.0
        %670 = vmatpush1.msra.mxu0 0.0
        %671 = vmatprep.subr.mxu0 0.0
        %672 = vmatpush1.msra.mxu0 0.0
        %673 = vmatprep.subr.mxu0 0.0
        %674 = vmatpush1.msra.mxu0 0.0
        %675 = vmatprep.subr.mxu0 0.0
        %676 = vmatpush1.msra.mxu0 0.0
        %677 = vmatprep.subr.mxu0 0.0
        %678 = vmatpush1.msra.mxu0 0.0
        %679 = vmatprep.subr.mxu0 0.0
        %680 = vmatpush1.msra.mxu0 %v646
        %681 = vmatprep.subr.mxu0 0.0
        %682 = vmatpush1.msra.mxu0 %v645
        %683 = vmatprep.subr.mxu0 0.0
        %684 = vmatpush2.msra.mxu0 0.0
        %685 = vmatprep.subr.mxu0 0.0
        %686 = vmatpush2.msra.mxu0 0.0
        %687 = vmatprep.subr.mxu0 0.0
        %688 = vmatpush2.msra.mxu0 0.0
        %689 = vmatprep.subr.mxu0 0.0
        %690 = vmatpush2.msra.mxu0 0.0
        %691 = vmatprep.subr.mxu0 0.0
        %692 = vmatpush2.msra.mxu0 0.0
        %693 = vmatprep.subr.mxu0 0.0
        %694 = vmatpush2.msra.mxu0 0.0
        %695 = vmatprep.subr.mxu0 0.0
        %696 = vmatpush2.msra.mxu0 0.0
        %697 = vmatprep.subr.mxu0 0.0
        %698 = vmatpush2.msra.mxu0 0.0
        %699 = vmatprep.subr.mxu0 0.0
        %700 = vmatpush2.msra.mxu0 0.0
        %701 = vmatprep.subr.mxu0 0.0
        %702 = vmatpush2.msra.mxu0 0.0
        %703 = vmatprep.subr.mxu0 0.0
        %704 = vmatpush2.msra.mxu0 0.0
        %705 = vmatprep.subr.mxu0 0.0
        %706 = vmatpush2.msra.mxu0 0.0
        %707 = vmatprep.subr.mxu0 0.0
        %708 = vmatpush2.msra.mxu0 0.0
        %709 = vmatprep.subr.mxu0 0.0
        %710 = vmatpush2.msra.mxu0 0.0
        %711 = vmatprep.subr.mxu0 0.0
        %712 = vmatpush2.msra.mxu0 0.0
        %713 = vmatprep.subr.mxu0 0.0
        %714 = vmatpush2.msra.mxu0 0.0
        %715 = vmatprep.mubr.f32.mxu0 0.0
        %716 = vmatmul.mubr.f32.gmra.mxu0 %v649
        %v717 = vpop.f32.mrf.mxu0
        %v718 = vadd.f32 0.0, %v717
        %v719 = vpop.f32.mrf.mxu0
        %720 = vdwg.mxu0
        %v721 = vld [vmem:[%s8] sm:$0x1]
        %v723 = vlaneseq
        %v724 = vshrl.u32 %v723, 7
        %v725 = vsub.s32 0, %v724
        %v726 = vrot.slane %v721, %v725
        %vm728 = vcmask 64512
        %v730 = vsel %vm728, %v643, 0
        %732 = vmatprep.subr.mxu0 0.0
        %733 = vmatpush1.msra.mxu0 0.0
        %734 = vmatprep.subr.mxu0 0.0
        %735 = vmatpush1.msra.mxu0 0.0
        %736 = vmatprep.subr.mxu0 0.0
        %737 = vmatpush1.msra.mxu0 0.0
        %738 = vmatprep.subr.mxu0 0.0
        %739 = vmatpush1.msra.mxu0 0.0
        %740 = vmatprep.subr.mxu0 0.0
        %741 = vmatpush1.msra.mxu0 0.0
        %742 = vmatprep.subr.mxu0 0.0
        %743 = vmatpush1.msra.mxu0 0.0
        %744 = vmatprep.subr.mxu0 0.0
        %745 = vmatpush1.msra.mxu0 0.0
        %746 = vmatprep.subr.mxu0 0.0
        %747 = vmatpush1.msra.mxu0 0.0
        %748 = vmatprep.subr.mxu0 0.0
        %749 = vmatpush1.msra.mxu0 0.0
        %750 = vmatprep.subr.mxu0 0.0
        %751 = vmatpush1.msra.mxu0 0.0
        %752 = vmatprep.subr.mxu0 0.0
        %753 = vmatpush1.msra.mxu0 0.0
        %754 = vmatprep.subr.mxu0 0.0
        %755 = vmatpush1.msra.mxu0 0.0
        %756 = vmatprep.subr.mxu0 0.0
        %757 = vmatpush1.msra.mxu0 0.0
        %758 = vmatprep.subr.mxu0 0.0
        %759 = vmatpush1.msra.mxu0 0.0
        %760 = vmatprep.subr.mxu0 0.0
        %761 = vmatpush1.msra.mxu0 0.0
        %762 = vmatprep.subr.mxu0 0.0
        %763 = vmatpush1.msra.mxu0 %v718
        %764 = vmatprep.subr.mxu0 0.0
        %765 = vmatpush2.msra.mxu0 0.0
        %766 = vmatprep.subr.mxu0 0.0
        %767 = vmatpush2.msra.mxu0 0.0
        %768 = vmatprep.subr.mxu0 0.0
        %769 = vmatpush2.msra.mxu0 0.0
        %770 = vmatprep.subr.mxu0 0.0
        %771 = vmatpush2.msra.mxu0 0.0
        %772 = vmatprep.subr.mxu0 0.0
        %773 = vmatpush2.msra.mxu0 0.0
        %774 = vmatprep.subr.mxu0 0.0
        %775 = vmatpush2.msra.mxu0 0.0
        %776 = vmatprep.subr.mxu0 0.0
        %777 = vmatpush2.msra.mxu0 0.0
        %778 = vmatprep.subr.mxu0 0.0
        %779 = vmatpush2.msra.mxu0 0.0
        %780 = vmatprep.subr.mxu0 0.0
        %781 = vmatpush2.msra.mxu0 0.0
        %782 = vmatprep.subr.mxu0 0.0
        %783 = vmatpush2.msra.mxu0 0.0
        %784 = vmatprep.subr.mxu0 0.0
        %785 = vmatpush2.msra.mxu0 0.0
        %786 = vmatprep.subr.mxu0 0.0
        %787 = vmatpush2.msra.mxu0 0.0
        %788 = vmatprep.subr.mxu0 0.0
        %789 = vmatpush2.msra.mxu0 0.0
        %790 = vmatprep.subr.mxu0 0.0
        %791 = vmatpush2.msra.mxu0 0.0
        %792 = vmatprep.subr.mxu0 0.0
        %793 = vmatpush2.msra.mxu0 0.0
        %794 = vmatprep.subr.mxu0 0.0
        %795 = vmatpush2.msra.mxu0 0.0
        %796 = vmatprep.mubr.f32.mxu0 0.0
        %797 = vmatmul.mubr.f32.gmra.mxu0 %v730
        %v798 = vpop.f32.mrf.mxu0
        %v799 = vadd.f32 %v726, %v798
        %v800 = vpop.f32.mrf.mxu0
        %801 = vdwg.mxu0
        %v802 = vmax.f32 %v799, 0.0
        %v803 = vld [vmem:[%s9] sm:$0xff]
        %v804 = vld [vmem:[%s9 + $0x8] sm:$0xff]
        %v805 = vld [vmem:[%s9 + $0x10] sm:$0xff]
        %v806 = vld [vmem:[%s9 + $0x18] sm:$0xff]
        %vm807 = vcmask 261120
        %v809 = vsel %vm807, %v802, 0
        %811 = vmatprep.subr.mxu0 0.0
        %812 = vmatpush1.msra.mxu0 0.0
        %813 = vmatprep.subr.mxu0 0.0
        %814 = vmatpush1.msra.mxu0 0.0
        %815 = vmatprep.subr.mxu0 0.0
        %816 = vmatpush1.msra.mxu0 0.0
        %817 = vmatprep.subr.mxu0 0.0
        %818 = vmatpush1.msra.mxu0 0.0
        %819 = vmatprep.subr.mxu0 0.0
        %820 = vmatpush1.msra.mxu0 0.0
        %821 = vmatprep.subr.mxu0 0.0
        %822 = vmatpush1.msra.mxu0 0.0
        %823 = vmatprep.subr.mxu0 0.0
        %824 = vmatpush1.msra.mxu0 0.0
        %825 = vmatprep.subr.mxu0 0.0
        %826 = vmatpush1.msra.mxu0 0.0
        %827 = vmatprep.subr.mxu0 0.0
        %828 = vmatpush1.msra.mxu0 0.0
        %829 = vmatprep.subr.mxu0 0.0
        %830 = vmatpush1.msra.mxu0 0.0
        %831 = vmatprep.subr.mxu0 0.0
        %832 = vmatpush1.msra.mxu0 0.0
        %833 = vmatprep.subr.mxu0 0.0
        %834 = vmatpush1.msra.mxu0 0.0
        %835 = vmatprep.subr.mxu0 0.0
        %836 = vmatpush1.msra.mxu0 %v806
        %837 = vmatprep.subr.mxu0 0.0
        %838 = vmatpush1.msra.mxu0 %v805
        %839 = vmatprep.subr.mxu0 0.0
        %840 = vmatpush1.msra.mxu0 %v804
        %841 = vmatprep.subr.mxu0 0.0
        %842 = vmatpush1.msra.mxu0 %v803
        %843 = vmatprep.subr.mxu0 0.0
        %844 = vmatpush2.msra.mxu0 0.0
        %845 = vmatprep.subr.mxu0 0.0
        %846 = vmatpush2.msra.mxu0 0.0
        %847 = vmatprep.subr.mxu0 0.0
        %848 = vmatpush2.msra.mxu0 0.0
        %849 = vmatprep.subr.mxu0 0.0
        %850 = vmatpush2.msra.mxu0 0.0
        %851 = vmatprep.subr.mxu0 0.0
        %852 = vmatpush2.msra.mxu0 0.0
        %853 = vmatprep.subr.mxu0 0.0
        %854 = vmatpush2.msra.mxu0 0.0
        %855 = vmatprep.subr.mxu0 0.0
        %856 = vmatpush2.msra.mxu0 0.0
        %857 = vmatprep.subr.mxu0 0.0
        %858 = vmatpush2.msra.mxu0 0.0
        %859 = vmatprep.subr.mxu0 0.0
        %860 = vmatpush2.msra.mxu0 0.0
        %861 = vmatprep.subr.mxu0 0.0
        %862 = vmatpush2.msra.mxu0 0.0
        %863 = vmatprep.subr.mxu0 0.0
        %864 = vmatpush2.msra.mxu0 0.0
        %865 = vmatprep.subr.mxu0 0.0
        %866 = vmatpush2.msra.mxu0 0.0
        %867 = vmatprep.subr.mxu0 0.0
        %868 = vmatpush2.msra.mxu0 0.0
        %869 = vmatprep.subr.mxu0 0.0
        %870 = vmatpush2.msra.mxu0 0.0
        %871 = vmatprep.subr.mxu0 0.0
        %872 = vmatpush2.msra.mxu0 0.0
        %873 = vmatprep.subr.mxu0 0.0
        %874 = vmatpush2.msra.mxu0 0.0
        %875 = vmatprep.mubr.f32.mxu0 0.0
        %876 = vmatmul.mubr.f32.gmra.mxu0 %v809
        %v877 = vpop.f32.mrf.mxu0
        %v878 = vadd.f32 0.0, %v877
        %v879 = vpop.f32.mrf.mxu0
        %880 = vdwg.mxu0
        %v881 = vld [vmem:[%s10] sm:$0x1]
        %v883 = vlaneseq
        %v884 = vshrl.u32 %v883, 7
        %v885 = vsub.s32 0, %v884
        %v886 = vrot.slane %v881, %v885
        %888 = vmatprep.subr.mxu0 0.0
        %889 = vmatpush1.msra.mxu0 0.0
        %890 = vmatprep.subr.mxu0 0.0
        %891 = vmatpush1.msra.mxu0 0.0
        %892 = vmatprep.subr.mxu0 0.0
        %893 = vmatpush1.msra.mxu0 0.0
        %894 = vmatprep.subr.mxu0 0.0
        %895 = vmatpush1.msra.mxu0 0.0
        %896 = vmatprep.subr.mxu0 0.0
        %897 = vmatpush1.msra.mxu0 0.0
        %898 = vmatprep.subr.mxu0 0.0
        %899 = vmatpush1.msra.mxu0 0.0
        %900 = vmatprep.subr.mxu0 0.0
        %901 = vmatpush1.msra.mxu0 0.0
        %902 = vmatprep.subr.mxu0 0.0
        %903 = vmatpush1.msra.mxu0 0.0
        %904 = vmatprep.subr.mxu0 0.0
        %905 = vmatpush1.msra.mxu0 0.0
        %906 = vmatprep.subr.mxu0 0.0
        %907 = vmatpush1.msra.mxu0 0.0
        %908 = vmatprep.subr.mxu0 0.0
        %909 = vmatpush1.msra.mxu0 0.0
        %910 = vmatprep.subr.mxu0 0.0
        %911 = vmatpush1.msra.mxu0 0.0
        %912 = vmatprep.subr.mxu0 0.0
        %913 = vmatpush1.msra.mxu0 0.0
        %914 = vmatprep.subr.mxu0 0.0
        %915 = vmatpush1.msra.mxu0 0.0
        %916 = vmatprep.subr.mxu0 0.0
        %917 = vmatpush1.msra.mxu0 0.0
        %918 = vmatprep.subr.mxu0 0.0
        %919 = vmatpush1.msra.mxu0 %v878
        %920 = vmatprep.subr.mxu0 0.0
        %921 = vmatpush2.msra.mxu0 0.0
        %922 = vmatprep.subr.mxu0 0.0
        %923 = vmatpush2.msra.mxu0 0.0
        %924 = vmatprep.subr.mxu0 0.0
        %925 = vmatpush2.msra.mxu0 0.0
        %926 = vmatprep.subr.mxu0 0.0
        %927 = vmatpush2.msra.mxu0 0.0
        %928 = vmatprep.subr.mxu0 0.0
        %929 = vmatpush2.msra.mxu0 0.0
        %930 = vmatprep.subr.mxu0 0.0
        %931 = vmatpush2.msra.mxu0 0.0
        %932 = vmatprep.subr.mxu0 0.0
        %933 = vmatpush2.msra.mxu0 0.0
        %934 = vmatprep.subr.mxu0 0.0
        %935 = vmatpush2.msra.mxu0 0.0
        %936 = vmatprep.subr.mxu0 0.0
        %937 = vmatpush2.msra.mxu0 0.0
        %938 = vmatprep.subr.mxu0 0.0
        %939 = vmatpush2.msra.mxu0 0.0
        %940 = vmatprep.subr.mxu0 0.0
        %941 = vmatpush2.msra.mxu0 0.0
        %942 = vmatprep.subr.mxu0 0.0
        %943 = vmatpush2.msra.mxu0 0.0
        %944 = vmatprep.subr.mxu0 0.0
        %945 = vmatpush2.msra.mxu0 0.0
        %946 = vmatprep.subr.mxu0 0.0
        %947 = vmatpush2.msra.mxu0 0.0
        %948 = vmatprep.subr.mxu0 0.0
        %949 = vmatpush2.msra.mxu0 0.0
        %950 = vmatprep.subr.mxu0 0.0
        %951 = vmatpush2.msra.mxu0 0.0
        %952 = vmatprep.mubr.f32.mxu0 0.0
        %953 = vmatmul.mubr.f32.gmra.mxu0 %v730
        %v954 = vpop.f32.mrf.mxu0
        %v955 = vadd.f32 %v886, %v954
        %v956 = vpop.f32.mrf.mxu0
        %957 = vdwg.mxu0
        %v958 = vmax.f32 %v955, 0.0
        %v959 = vxor.u32 %v958, 2147483648
        %v960 = vmul.f32 %v959, 1.442695
        %v961 = vpow.pop %v960
        %v962 = vadd.f32 %v961, 1.0
        %v963 = vrcp.pop %v962
        %v964 = vmul.f32 1.0, %v963
        %v965 = vld [vmem:[%s552] sm:$0xff]
        %v966 = vsub.f32 1.0, %v965
        %v967 = vmul.f32 %v966, 1e+10
        %969 = vset.pattern.permute.xlu0 0
        %970 = vperm.xlu0 %969, %v967
        %v971 = vpop.permute.xlu0 %970
        %v973 = vsub.f32 %v642, %v971
        %v974 = vld [vmem:[%s556] sm:$0xff]
        %v975 = vsub.f32 1.0, %v974
        %v976 = vmul.f32 %v975, 1e+10
        %978 = vset.pattern.permute.xlu0 0
        %979 = vperm.xlu0 %978, %v976
        %v980 = vpop.permute.xlu0 %979
        %v982 = vsub.f32 %v964, %v980
        %v983 = vsel %vm807, %v973, -inf
        %v984 = vrot.slane %v983, 4
        %v985 = vmax.f32 %v983, %v984
        %v986 = vrot.slane %v985, 2
        %v987 = vmax.f32 %v985, %v986
        %v988 = vrot.slane %v987, 1
        %v989 = vmax.f32 %v987, %v988
        %v990 = vsel %vm807, %v982, -inf
        %v991 = vrot.slane %v990, 4
        %v992 = vmax.f32 %v990, %v991
        %v993 = vrot.slane %v992, 2
        %v994 = vmax.f32 %v992, %v993
        %v995 = vrot.slane %v994, 1
        %v996 = vmax.f32 %v994, %v995
        %v997 = vmax.f32 %v989, %v996
        %v998 = vld [vmem:[%s11] sm:$0xff]
        %v999 = vld [vmem:[%s11 + $0x8] sm:$0xff]
        %v1000 = vld [vmem:[%s11 + $0x10] sm:$0xff]
        %v1001 = vld [vmem:[%s11 + $0x18] sm:$0xff]
        %v1002 = vld [vmem:[%s12] sm:$0x1]
        %v1004 = vsel %vm807, %v997, 0
        %1006 = vmatprep.subr.mxu0 0.0
        %1007 = vmatpush1.msra.mxu0 0.0
        %1008 = vmatprep.subr.mxu0 0.0
        %1009 = vmatpush1.msra.mxu0 0.0
        %1010 = vmatprep.subr.mxu0 0.0
        %1011 = vmatpush1.msra.mxu0 0.0
        %1012 = vmatprep.subr.mxu0 0.0
        %1013 = vmatpush1.msra.mxu0 0.0
        %1014 = vmatprep.subr.mxu0 0.0
        %1015 = vmatpush1.msra.mxu0 0.0
        %1016 = vmatprep.subr.mxu0 0.0
        %1017 = vmatpush1.msra.mxu0 0.0
        %1018 = vmatprep.subr.mxu0 0.0
        %1019 = vmatpush1.msra.mxu0 0.0
        %1020 = vmatprep.subr.mxu0 0.0
        %1021 = vmatpush1.msra.mxu0 0.0
        %1022 = vmatprep.subr.mxu0 0.0
        %1023 = vmatpush1.msra.mxu0 0.0
        %1024 = vmatprep.subr.mxu0 0.0
        %1025 = vmatpush1.msra.mxu0 0.0
        %1026 = vmatprep.subr.mxu0 0.0
        %1027 = vmatpush1.msra.mxu0 0.0
        %1028 = vmatprep.subr.mxu0 0.0
        %1029 = vmatpush1.msra.mxu0 0.0
        %1030 = vmatprep.subr.mxu0 0.0
        %1031 = vmatpush1.msra.mxu0 %v1001
        %1032 = vmatprep.subr.mxu0 0.0
        %1033 = vmatpush1.msra.mxu0 %v1000
        %1034 = vmatprep.subr.mxu0 0.0
        %1035 = vmatpush1.msra.mxu0 %v999
        %1036 = vmatprep.subr.mxu0 0.0
        %1037 = vmatpush1.msra.mxu0 %v998
        %1038 = vmatprep.subr.mxu0 0.0
        %1039 = vmatpush2.msra.mxu0 0.0
        %1040 = vmatprep.subr.mxu0 0.0
        %1041 = vmatpush2.msra.mxu0 0.0
        %1042 = vmatprep.subr.mxu0 0.0
        %1043 = vmatpush2.msra.mxu0 0.0
        %1044 = vmatprep.subr.mxu0 0.0
        %1045 = vmatpush2.msra.mxu0 0.0
        %1046 = vmatprep.subr.mxu0 0.0
        %1047 = vmatpush2.msra.mxu0 0.0
        %1048 = vmatprep.subr.mxu0 0.0
        %1049 = vmatpush2.msra.mxu0 0.0
        %1050 = vmatprep.subr.mxu0 0.0
        %1051 = vmatpush2.msra.mxu0 0.0
        %1052 = vmatprep.subr.mxu0 0.0
        %1053 = vmatpush2.msra.mxu0 0.0
        %1054 = vmatprep.subr.mxu0 0.0
        %1055 = vmatpush2.msra.mxu0 0.0
        %1056 = vmatprep.subr.mxu0 0.0
        %1057 = vmatpush2.msra.mxu0 0.0
        %1058 = vmatprep.subr.mxu0 0.0
        %1059 = vmatpush2.msra.mxu0 0.0
        %1060 = vmatprep.subr.mxu0 0.0
        %1061 = vmatpush2.msra.mxu0 0.0
        %1062 = vmatprep.subr.mxu0 0.0
        %1063 = vmatpush2.msra.mxu0 0.0
        %1064 = vmatprep.subr.mxu0 0.0
        %1065 = vmatpush2.msra.mxu0 0.0
        %1066 = vmatprep.subr.mxu0 0.0
        %1067 = vmatpush2.msra.mxu0 0.0
        %1068 = vmatprep.subr.mxu0 0.0
        %1069 = vmatpush2.msra.mxu0 0.0
        %1070 = vmatprep.mubr.f32.mxu0 0.0
        %1071 = vmatmul.mubr.f32.gmra.mxu0 %v1004
        %v1072 = vpop.f32.mrf.mxu0
        %v1073 = vadd.f32 %v1002, %v1072
        %v1074 = vpop.f32.mrf.mxu0
        %1075 = vdwg.mxu0
        %v1076 = vmax.f32 %v1073, 0.0
        %v1077 = vld [vmem:[%s13] sm:$0xff]
        %v1078 = vld [vmem:[%s13 + $0x8] sm:$0xff]
        %v1079 = vld [vmem:[%s13 + $0x10] sm:$0xff]
        %v1080 = vld [vmem:[%s13 + $0x18] sm:$0xff]
        %v1081 = vld [vmem:[%s13 + $0x20] sm:$0xff]
        %v1082 = vld [vmem:[%s13 + $0x28] sm:$0xff]
        %v1083 = vld [vmem:[%s13 + $0x30] sm:$0xff]
        %v1084 = vld [vmem:[%s13 + $0x38] sm:$0xff]
        %v1085 = vld [vmem:[%s13 + $0x40] sm:$0xff]
        %v1086 = vld [vmem:[%s13 + $0x48] sm:$0xff]
        %v1087 = vld [vmem:[%s13 + $0x50] sm:$0xff]
        %v1088 = vld [vmem:[%s13 + $0x58] sm:$0xff]
        %v1089 = vld [vmem:[%s13 + $0x60] sm:$0xff]
        %v1090 = vld [vmem:[%s13 + $0x68] sm:$0xff]
        %v1091 = vld [vmem:[%s13 + $0x70] sm:$0xff]
        %v1092 = vld [vmem:[%s13 + $0x78] sm:$0xff]
        %v1093 = vld [vmem:[%s14] sm:$0x1]
        %1094 = vmatprep.subr.mxu0 0.0
        %1095 = vmatpush1.msra.mxu0 %v1092
        %1096 = vmatprep.subr.mxu0 0.0
        %1097 = vmatpush1.msra.mxu0 %v1091
        %1098 = vmatprep.subr.mxu0 0.0
        %1099 = vmatpush1.msra.mxu0 %v1090
        %1100 = vmatprep.subr.mxu0 0.0
        %1101 = vmatpush1.msra.mxu0 %v1089
        %1102 = vmatprep.subr.mxu0 0.0
        %1103 = vmatpush1.msra.mxu0 %v1088
        %1104 = vmatprep.subr.mxu0 0.0
        %1105 = vmatpush1.msra.mxu0 %v1087
        %1106 = vmatprep.subr.mxu0 0.0
        %1107 = vmatpush1.msra.mxu0 %v1086
        %1108 = vmatprep.subr.mxu0 0.0
        %1109 = vmatpush1.msra.mxu0 %v1085
        %1110 = vmatprep.subr.mxu0 0.0
        %1111 = vmatpush1.msra.mxu0 %v1084
        %1112 = vmatprep.subr.mxu0 0.0
        %1113 = vmatpush1.msra.mxu0 %v1083
        %1114 = vmatprep.subr.mxu0 0.0
        %1115 = vmatpush1.msra.mxu0 %v1082
        %1116 = vmatprep.subr.mxu0 0.0
        %1117 = vmatpush1.msra.mxu0 %v1081
        %1118 = vmatprep.subr.mxu0 0.0
        %1119 = vmatpush1.msra.mxu0 %v1080
        %1120 = vmatprep.subr.mxu0 0.0
        %1121 = vmatpush1.msra.mxu0 %v1079
        %1122 = vmatprep.subr.mxu0 0.0
        %1123 = vmatpush1.msra.mxu0 %v1078
        %1124 = vmatprep.subr.mxu0 0.0
        %1125 = vmatpush1.msra.mxu0 %v1077
        %1126 = vmatprep.subr.mxu0 0.0
        %1127 = vmatpush2.msra.mxu0 0.0
        %1128 = vmatprep.subr.mxu0 0.0
        %1129 = vmatpush2.msra.mxu0 0.0
        %1130 = vmatprep.subr.mxu0 0.0
        %1131 = vmatpush2.msra.mxu0 0.0
        %1132 = vmatprep.subr.mxu0 0.0
        %1133 = vmatpush2.msra.mxu0 0.0
        %1134 = vmatprep.subr.mxu0 0.0
        %1135 = vmatpush2.msra.mxu0 0.0
        %1136 = vmatprep.subr.mxu0 0.0
        %1137 = vmatpush2.msra.mxu0 0.0
        %1138 = vmatprep.subr.mxu0 0.0
        %1139 = vmatpush2.msra.mxu0 0.0
        %1140 = vmatprep.subr.mxu0 0.0
        %1141 = vmatpush2.msra.mxu0 0.0
        %1142 = vmatprep.subr.mxu0 0.0
        %1143 = vmatpush2.msra.mxu0 0.0
        %1144 = vmatprep.subr.mxu0 0.0
        %1145 = vmatpush2.msra.mxu0 0.0
        %1146 = vmatprep.subr.mxu0 0.0
        %1147 = vmatpush2.msra.mxu0 0.0
        %1148 = vmatprep.subr.mxu0 0.0
        %1149 = vmatpush2.msra.mxu0 0.0
        %1150 = vmatprep.subr.mxu0 0.0
        %1151 = vmatpush2.msra.mxu0 0.0
        %1152 = vmatprep.subr.mxu0 0.0
        %1153 = vmatpush2.msra.mxu0 0.0
        %1154 = vmatprep.subr.mxu0 0.0
        %1155 = vmatpush2.msra.mxu0 0.0
        %1156 = vmatprep.subr.mxu0 0.0
        %1157 = vmatpush2.msra.mxu0 0.0
        %1158 = vmatprep.mubr.f32.mxu0 0.0
        %1159 = vmatmul.mubr.f32.gmra.mxu0 %v1076
        %v1160 = vpop.f32.mrf.mxu0
        %v1161 = vadd.f32 %v1093, %v1160
        %v1162 = vpop.f32.mrf.mxu0
        %1163 = vdwg.mxu0
        %1164 = vst [vmem:[%s536] sm:$0x1] %v1161
        %s1165 = sand.u32 %s377, 1
        %s1166 = scalar_lea.sflag [#allocation3], %s1165
        %s1167 = sand.u32 %s377, 1
        %s1168 = scalar_lea.vmem [#allocation2], %s1167
        // Predicated region
        $region81: #{type_classifier_forward.1} parent=79 // pred_check
          %p1169 = pneg %p387
        $region82: #{type_classifier_forward.1} parent=79 // pred_check_branch
          %1171 = sbr.rel (%p1169) target = $region84
        $region83: #{type_classifier_forward.1} parent=79 // pred_region
          %s1173 = ssub.s32 16, 16
          %1174 = vsyncadd %s1166, %s1173
          %s1175 = smul.addr %s29, 16
          %s1176 = scalar_lea.hbm %s15, %s1175
          %s1178 = sshll.u32 %s1168, 4
          %s1179 = int_to_ptr.vmem [resolvable:$true] %s1178
          %1181 = dma.vmem_to_hbm [thread:$0]  %s1179, 16, %s1176, %s1166
        $region84: #{type_classifier_forward.1} parent=79 // pred_fallthru
          _
      $region80: #{type_classifier_forward.1} parent=5 // pred_fallthru
        _
      %p1182 = scmp.le.s32.totalorder 2, %s24
      // Predicated region
      $region85: #{type_classifier_forward.1} parent=5 // pred_check
        %p1183 = pneg %p1182
      $region86: #{type_classifier_forward.1} parent=5 // pred_check_branch
        %1185 = sbr.rel (%p1183) target = $region88
      $region87: #{type_classifier_forward.1} parent=5 // pred_region
        %s1186 = ssub.s32 %s24, 2
        // Predicated region
        $region89: #{type_classifier_forward.1} parent=87 // pred_check
          %p1187 = pneg %p393
        $region90: #{type_classifier_forward.1} parent=87 // pred_check_branch
          %1189 = sbr.rel (%p1187) target = $region92
        $region91: #{type_classifier_forward.1} parent=87 // pred_region
          %s1190 = sand.u32 %s378, 1
          %s1191 = scalar_lea.sflag [#allocation3], %s1190
          %s1192 = sand.u32 %s378, 1
          %s1193 = scalar_lea.vmem [#allocation2], %s1192
          %1194 = dma.done %s1191, 16
        $region92: #{type_classifier_forward.1} parent=87 // pred_fallthru
          _
      $region88: #{type_classifier_forward.1} parent=5 // pred_fallthru
        _
    $region6: #{type_classifier_forward.1} parent=1 // loop_footer
      %s28 = sadd.s32 1, %s24
    $region7: #{type_classifier_forward.1} parent=1 // loop_footer_branch
      %23 = sbr.rel target = $region3
    $region8: #{type_classifier_forward.1} parent=1 // loop_exit
      _
    %1195 = vsyncpa [#allocation3], 1
    %s1196 = scalar_lea.sflag [#allocation3], 1
    %1197 = vsyncpa %s1196, 1

</llo_original>
